<compile_context>
chip_gen: v6e
topology: v6e:2x2x1
jax: 0.10.0
libtpu: 0.0.40
codegen_flags: <defaults>
</compile_context>

<pallas_src>
import functools

import numpy as np
import jax
import jax.numpy as jnp
from jax.experimental import pallas as pl
from jax.experimental.pallas import tpu as pltpu


# ----------------------------- Pallas conv kernel -----------------------------
def _ropconv3_kernel(x_ref, w_ref, m_ref, b_ref, o_ref, *,
                     N, H, W, Cin, Cout, K, PAD):
    """Lane-dense stride-1 'same' convolution.

    x_ref: (Cin, PAD + N*H*W + PAD)  bf16, flat (n, i, j) positions on lanes,
                                      zero halo of PAD lanes on both sides.
    w_ref: (K*K, Cout, Cin)           bf16 per-tap weights, tap index = kh*K + kw.
    m_ref: (K*K, 1, N*H*W)            bf16 0/1 validity mask per tap.
    b_ref: (Cout, 1)                  f32 conv bias.
    o_ref: (N, Cout, H*W)             f32 output (NCHW with H, W flattened).
    """
    p = K // 2
    HW = H * W
    M = N * HW

    acc = jnp.zeros((Cout, M), jnp.float32)
    for kh in range(K):
        for kw in range(K):
            t = kh * K + kw
            off = (kh - p) * W + (kw - p)                   # flat lane shift for this tap
            shifted = x_ref[:, PAD + off:PAD + off + M]     # (Cin, M) bf16 lane-offset slice
            tap = shifted * m_ref[t]                        # zero out-of-image positions
            acc += jnp.dot(w_ref[t], tap,
                           preferred_element_type=jnp.float32)   # (Cout, M) f32
    acc = acc + b_ref[...]                                   # (Cout, 1) broadcast along lanes

    # Unmasked, lane-dense stores: (Cout, HW=256) slabs at 128-aligned lane offsets.
    for n in range(N):
        o_ref[n] = acc[:, n * HW:(n + 1) * HW].astype(o_ref.dtype)


def ropconv3_conv(x_flat, w_taps, masks, bias, *, N, H, W, Cin, Cout, K, PAD):
    HW = H * W
    kernel = functools.partial(_ropconv3_kernel, N=N, H=H, W=W,
                               Cin=Cin, Cout=Cout, K=K, PAD=PAD)
    return pl.pallas_call(
        kernel,
        out_shape=jax.ShapeDtypeStruct((N, Cout, HW), jnp.float32),
        grid_spec=pltpu.PrefetchScalarGridSpec(
            num_scalar_prefetch=0,
            grid=(1,),                       # batch is folded into the matmul M dim
            in_specs=[
                pl.BlockSpec(x_flat.shape, lambda i: (0, 0)),
                pl.BlockSpec(w_taps.shape, lambda i: (0, 0, 0)),
                pl.BlockSpec(masks.shape, lambda i: (0, 0, 0)),
                pl.BlockSpec(bias.shape, lambda i: (0, 0)),
            ],
            out_specs=pl.BlockSpec((N, Cout, HW), lambda i: (0, 0, 0)),
        ),
        compiler_params=pltpu.CompilerParams(dimension_semantics=("arbitrary",)),
    )(x_flat, w_taps, masks, bias)


# ----------------------- parameter init (deterministic) -----------------------
def init_params(key, in_channels, out_channels, kernel_size, expansion=4):
    k = kernel_size
    dims = [in_channels,
            in_channels * k,
            in_channels * k * k,
            expansion * in_channels * k * k * out_channels]
    keys = jax.random.split(key, 8)
    # latent_vector ~ kaiming_normal on (1, in_channels)
    latent = jax.random.normal(keys[0], (1, in_channels), jnp.float32) * jnp.sqrt(2.0 / in_channels)
    Ws, bs = [], []
    for i in range(3):
        fan_in = dims[i]
        Wm = jax.random.normal(keys[1 + i], (dims[i + 1], dims[i]), jnp.float32) / jnp.sqrt(fan_in)
        bv = jax.random.normal(keys[4 + i], (dims[i + 1],), jnp.float32) * 0.01
        Ws.append(Wm)
        bs.append(bv)
    conv_bias = jnp.zeros((out_channels,), jnp.float32)      # nn.Parameter(torch.zeros(out_channels))
    return latent, tuple(Ws), tuple(bs), conv_bias


def hypernet_weight(latent, Ws, bs, *, in_channels, out_channels, kernel_size,
                    expansion=4, bn_eps=1e-5):
    """Hypernet MLP + BatchNorm2d over the generated weight tensor (tiny, plain JAX).

    BatchNorm2d(in_channels*expansion) is evaluated as the PyTorch module would in
    its default training state: batch statistics over (out_channels, K, K), biased
    variance, gamma=1, beta=0 (fresh module).
    """
    k = kernel_size
    h = jnp.maximum(latent @ Ws[0].T + bs[0], 0.0)
    h = jnp.maximum(h @ Ws[1].T + bs[1], 0.0)
    h = h @ Ws[2].T + bs[2]
    w = h.reshape(out_channels, in_channels * expansion, k, k)
    mu = w.mean(axis=(0, 2, 3), keepdims=True)
    var = w.var(axis=(0, 2, 3), keepdims=True)
    w = (w - mu) * jax.lax.rsqrt(var + bn_eps)
    w = w.reshape(out_channels, in_channels, expansion, k, k).sum(axis=2)
    return w                                                  # (Cout, Cin, K, K), OIHW


# ---------------------------------- forward ----------------------------------
@functools.partial(jax.jit,
                   static_argnames=("out_channels", "kernel_size", "stride", "expansion"))
def ropconv3_forward(x_nchw, latent, Ws, bs, conv_bias, *,
                     out_channels, kernel_size, stride=1, expansion=4):
    N, Cin, H, W = x_nchw.shape
    K = kernel_size
    p = K // 2
    Cout = out_channels

    # hypernet + batchnorm -> OIHW conv weight (weight-only glue, plain JAX)
    w_oihw = hypernet_weight(latent, Ws, bs, in_channels=Cin, out_channels=Cout,
                             kernel_size=K, expansion=expansion)
    # (K*K, Cout, Cin) per-tap weights for the kernel, bf16 operands
    w_taps = jnp.transpose(w_oihw, (2, 3, 0, 1)).reshape(K * K, Cout, Cin).astype(jnp.bfloat16)

    M = N * H * W
    PAD = -(-(p * W + p) // 128) * 128            # zero halo, rounded up to 128 lanes
    # single fused prep pass on x: NCHW -> (Cin, N*H*W) flat slab + halo pad + bf16 cast
    x_flat = jnp.transpose(x_nchw, (1, 0, 2, 3)).reshape(Cin, M)
    x_flat = jnp.pad(x_flat, ((0, 0), (PAD, PAD))).astype(jnp.bfloat16)

    # per-tap validity masks over flattened (n, i, j) positions: compile-time constants
    pos = np.arange(M, dtype=np.int64)
    row = (pos // W) % H
    col = pos % W
    mask_list = []
    for kh in range(K):
        for kw in range(K):
            dh, dw = kh - p, kw - p
            valid = ((row + dh >= 0) & (row + dh < H) &
                     (col + dw >= 0) & (col + dw < W))
            mask_list.append(valid)
    masks = jnp.asarray(np.stack(mask_list).astype(np.float32))
    masks = masks.astype(jnp.bfloat16).reshape(K * K, 1, M)

    bias = conv_bias.astype(jnp.float32).reshape(Cout, 1)

    out = ropconv3_conv(x_flat, w_taps, masks, bias,
                        N=N, H=H, W=W, Cin=Cin, Cout=Cout, K=K, PAD=PAD)
    out = out.reshape(N, Cout, H, W)              # free: contiguous reshape to NCHW
    if stride > 1:
        # TODO(synk): for stride>1, compute only the strided output positions in-kernel
        # instead of dense-then-subsample (correct but wastes MXU/writeback bandwidth).
        out = out[:, :, ::stride, ::stride]
    return out


# ------------------------------------ main ------------------------------------
if __name__ == "__main__":
    N, Cin, H, W = 2, 4, 16, 16
    Cout, K, stride = 8, 3, 1

    key = jax.random.PRNGKey(0)
    k_x, k_p = jax.random.split(key)
    x = jax.random.normal(k_x, (N, Cin, H, W), jnp.float32)
    latent, Ws, bs, conv_bias = init_params(k_p, Cin, Cout, K)

    out = ropconv3_forward(x, latent, Ws, bs, conv_bias,
                           out_channels=Cout, kernel_size=K, stride=stride)
    out = jax.block_until_ready(out)

    # Reference check against XLA conv (same generated, batch-normalized weights).
    w_ref = hypernet_weight(latent, Ws, bs, in_channels=Cin, out_channels=Cout,
                            kernel_size=K)
    ref = jax.lax.conv_general_dilated(
        x, w_ref, window_strides=(stride, stride),
        padding=[(K // 2, K // 2), (K // 2, K // 2)],
        dimension_numbers=("NCHW", "OIHW", "NCHW"),
    ) + conv_bias[None, :, None, None]
    assert out.shape == ref.shape
    # bf16 operands / f32 accumulation -> relaxed tolerance vs the f32 reference
    max_err = float(jnp.max(jnp.abs(out - ref)))
    scale = float(jnp.max(jnp.abs(ref)))
    assert max_err <= 3e-2 * scale + 1e-3, (max_err, scale)

    print("KERNEL_OK")
</pallas_src>

<mosaic_0001>
module attributes {stable_mosaic.version = 11 : i64} {
  func.func @_ropconv3_kernel(%arg0: i32, %arg1: memref<4x768xbf16, #tpu.memory_space<vmem>>, %arg2: memref<9x8x4xbf16, #tpu.memory_space<vmem>>, %arg3: memref<9x1x512xbf16, #tpu.memory_space<vmem>>, %arg4: memref<8x1xf32, #tpu.memory_space<vmem>>, %arg5: memref<2x8x256xf32, #tpu.memory_space<vmem>>) attributes {dimension_semantics = [#tpu.dimension_semantics<arbitrary>], iteration_bounds = array<i64: 1>, scalar_prefetch = 0 : i64, scratch_operands = 0 : i64, tpu.core_type = #tpu.core_type<tc>, window_params = [{pipeline_mode = #tpu.pipeline_mode<synchronous>, transform_indices = @transform_0, window_bounds = array<i64: 4, 768>}, {pipeline_mode = #tpu.pipeline_mode<synchronous>, transform_indices = @transform_1, window_bounds = array<i64: 9, 8, 4>}, {pipeline_mode = #tpu.pipeline_mode<synchronous>, transform_indices = @transform_2, window_bounds = array<i64: 9, 1, 512>}, {pipeline_mode = #tpu.pipeline_mode<synchronous>, transform_indices = @transform_3, window_bounds = array<i64: 8, 1>}, {pipeline_mode = #tpu.pipeline_mode<synchronous>, transform_indices = @transform_4, window_bounds = array<i64: 2, 8, 256>}]} {
    %cst = arith.constant 0.000000e+00 : f32
    %0 = vector.broadcast %cst : f32 to vector<8x512xf32>
    %c0 = arith.constant 0 : index
    %c111 = arith.constant 111 : index
    %1 = vector.load %arg1[%c0, %c111] : memref<4x768xbf16, #tpu.memory_space<vmem>>, vector<4x512xbf16>
    %c0_0 = arith.constant 0 : index
    %c0_1 = arith.constant 0 : index
    %c0_2 = arith.constant 0 : index
    %2 = vector.load %arg3[%c0_0, %c0_1, %c0_2] : memref<9x1x512xbf16, #tpu.memory_space<vmem>>, vector<1x1x512xbf16>
    %3 = vector.shape_cast %2 : vector<1x1x512xbf16> to vector<1x512xbf16>
    %4 = vector.broadcast %3 : vector<1x512xbf16> to vector<4x512xbf16>
    %5 = arith.mulf %1, %4 : vector<4x512xbf16>
    %c0_3 = arith.constant 0 : index
    %c0_4 = arith.constant 0 : index
    %c0_5 = arith.constant 0 : index
    %6 = vector.load %arg2[%c0_3, %c0_4, %c0_5] : memref<9x8x4xbf16, #tpu.memory_space<vmem>>, vector<1x8x4xbf16>
    %7 = vector.shape_cast %6 : vector<1x8x4xbf16> to vector<8x4xbf16>
    %cst_6 = arith.constant dense<0.000000e+00> : vector<8x512xf32>
    %8 = tpu.matmul %7, %5, %cst_6 {dimension_numbers = #tpu.dot_dimension_numbers<[1], [0], [0], [1], [0, 0, 1, 1], [], []>} : vector<8x4xbf16>, vector<4x512xbf16>, vector<8x512xf32> -> vector<8x512xf32>
    %9 = arith.addf %0, %8 : vector<8x512xf32>
    %c0_7 = arith.constant 0 : index
    %c112 = arith.constant 112 : index
    %10 = vector.load %arg1[%c0_7, %c112] : memref<4x768xbf16, #tpu.memory_space<vmem>>, vector<4x512xbf16>
    %c1 = arith.constant 1 : index
    %c0_8 = arith.constant 0 : index
    %c0_9 = arith.constant 0 : index
    %11 = vector.load %arg3[%c1, %c0_8, %c0_9] : memref<9x1x512xbf16, #tpu.memory_space<vmem>>, vector<1x1x512xbf16>
    %12 = vector.shape_cast %11 : vector<1x1x512xbf16> to vector<1x512xbf16>
    %13 = vector.broadcast %12 : vector<1x512xbf16> to vector<4x512xbf16>
    %14 = arith.mulf %10, %13 : vector<4x512xbf16>
    %c1_10 = arith.constant 1 : index
    %c0_11 = arith.constant 0 : index
    %c0_12 = arith.constant 0 : index
    %15 = vector.load %arg2[%c1_10, %c0_11, %c0_12] : memref<9x8x4xbf16, #tpu.memory_space<vmem>>, vector<1x8x4xbf16>
    %16 = vector.shape_cast %15 : vector<1x8x4xbf16> to vector<8x4xbf16>
    %cst_13 = arith.constant dense<0.000000e+00> : vector<8x512xf32>
    %17 = tpu.matmul %16, %14, %cst_13 {dimension_numbers = #tpu.dot_dimension_numbers<[1], [0], [0], [1], [0, 0, 1, 1], [], []>} : vector<8x4xbf16>, vector<4x512xbf16>, vector<8x512xf32> -> vector<8x512xf32>
    %18 = arith.addf %9, %17 : vector<8x512xf32>
    %c0_14 = arith.constant 0 : index
    %c113 = arith.constant 113 : index
    %19 = vector.load %arg1[%c0_14, %c113] : memref<4x768xbf16, #tpu.memory_space<vmem>>, vector<4x512xbf16>
    %c2 = arith.constant 2 : index
    %c0_15 = arith.constant 0 : index
    %c0_16 = arith.constant 0 : index
    %20 = vector.load %arg3[%c2, %c0_15, %c0_16] : memref<9x1x512xbf16, #tpu.memory_space<vmem>>, vector<1x1x512xbf16>
    %21 = vector.shape_cast %20 : vector<1x1x512xbf16> to vector<1x512xbf16>
    %22 = vector.broadcast %21 : vector<1x512xbf16> to vector<4x512xbf16>
    %23 = arith.mulf %19, %22 : vector<4x512xbf16>
    %c2_17 = arith.constant 2 : index
    %c0_18 = arith.constant 0 : index
    %c0_19 = arith.constant 0 : index
    %24 = vector.load %arg2[%c2_17, %c0_18, %c0_19] : memref<9x8x4xbf16, #tpu.memory_space<vmem>>, vector<1x8x4xbf16>
    %25 = vector.shape_cast %24 : vector<1x8x4xbf16> to vector<8x4xbf16>
    %cst_20 = arith.constant dense<0.000000e+00> : vector<8x512xf32>
    %26 = tpu.matmul %25, %23, %cst_20 {dimension_numbers = #tpu.dot_dimension_numbers<[1], [0], [0], [1], [0, 0, 1, 1], [], []>} : vector<8x4xbf16>, vector<4x512xbf16>, vector<8x512xf32> -> vector<8x512xf32>
    %27 = arith.addf %18, %26 : vector<8x512xf32>
    %c0_21 = arith.constant 0 : index
    %c127 = arith.constant 127 : index
    %28 = vector.load %arg1[%c0_21, %c127] : memref<4x768xbf16, #tpu.memory_space<vmem>>, vector<4x512xbf16>
    %c3 = arith.constant 3 : index
    %c0_22 = arith.constant 0 : index
    %c0_23 = arith.constant 0 : index
    %29 = vector.load %arg3[%c3, %c0_22, %c0_23] : memref<9x1x512xbf16, #tpu.memory_space<vmem>>, vector<1x1x512xbf16>
    %30 = vector.shape_cast %29 : vector<1x1x512xbf16> to vector<1x512xbf16>
    %31 = vector.broadcast %30 : vector<1x512xbf16> to vector<4x512xbf16>
    %32 = arith.mulf %28, %31 : vector<4x512xbf16>
    %c3_24 = arith.constant 3 : index
    %c0_25 = arith.constant 0 : index
    %c0_26 = arith.constant 0 : index
    %33 = vector.load %arg2[%c3_24, %c0_25, %c0_26] : memref<9x8x4xbf16, #tpu.memory_space<vmem>>, vector<1x8x4xbf16>
    %34 = vector.shape_cast %33 : vector<1x8x4xbf16> to vector<8x4xbf16>
    %cst_27 = arith.constant dense<0.000000e+00> : vector<8x512xf32>
    %35 = tpu.matmul %34, %32, %cst_27 {dimension_numbers = #tpu.dot_dimension_numbers<[1], [0], [0], [1], [0, 0, 1, 1], [], []>} : vector<8x4xbf16>, vector<4x512xbf16>, vector<8x512xf32> -> vector<8x512xf32>
    %36 = arith.addf %27, %35 : vector<8x512xf32>
    %c0_28 = arith.constant 0 : index
    %c128 = arith.constant 128 : index
    %37 = vector.load %arg1[%c0_28, %c128] : memref<4x768xbf16, #tpu.memory_space<vmem>>, vector<4x512xbf16>
    %c4 = arith.constant 4 : index
    %c0_29 = arith.constant 0 : index
    %c0_30 = arith.constant 0 : index
    %38 = vector.load %arg3[%c4, %c0_29, %c0_30] : memref<9x1x512xbf16, #tpu.memory_space<vmem>>, vector<1x1x512xbf16>
    %39 = vector.shape_cast %38 : vector<1x1x512xbf16> to vector<1x512xbf16>
    %40 = vector.broadcast %39 : vector<1x512xbf16> to vector<4x512xbf16>
    %41 = arith.mulf %37, %40 : vector<4x512xbf16>
    %c4_31 = arith.constant 4 : index
    %c0_32 = arith.constant 0 : index
    %c0_33 = arith.constant 0 : index
    %42 = vector.load %arg2[%c4_31, %c0_32, %c0_33] : memref<9x8x4xbf16, #tpu.memory_space<vmem>>, vector<1x8x4xbf16>
    %43 = vector.shape_cast %42 : vector<1x8x4xbf16> to vector<8x4xbf16>
    %cst_34 = arith.constant dense<0.000000e+00> : vector<8x512xf32>
    %44 = tpu.matmul %43, %41, %cst_34 {dimension_numbers = #tpu.dot_dimension_numbers<[1], [0], [0], [1], [0, 0, 1, 1], [], []>} : vector<8x4xbf16>, vector<4x512xbf16>, vector<8x512xf32> -> vector<8x512xf32>
    %45 = arith.addf %36, %44 : vector<8x512xf32>
    %c0_35 = arith.constant 0 : index
    %c129 = arith.constant 129 : index
    %46 = vector.load %arg1[%c0_35, %c129] : memref<4x768xbf16, #tpu.memory_space<vmem>>, vector<4x512xbf16>
    %c5 = arith.constant 5 : index
    %c0_36 = arith.constant 0 : index
    %c0_37 = arith.constant 0 : index
    %47 = vector.load %arg3[%c5, %c0_36, %c0_37] : memref<9x1x512xbf16, #tpu.memory_space<vmem>>, vector<1x1x512xbf16>
    %48 = vector.shape_cast %47 : vector<1x1x512xbf16> to vector<1x512xbf16>
    %49 = vector.broadcast %48 : vector<1x512xbf16> to vector<4x512xbf16>
    %50 = arith.mulf %46, %49 : vector<4x512xbf16>
    %c5_38 = arith.constant 5 : index
    %c0_39 = arith.constant 0 : index
    %c0_40 = arith.constant 0 : index
    %51 = vector.load %arg2[%c5_38, %c0_39, %c0_40] : memref<9x8x4xbf16, #tpu.memory_space<vmem>>, vector<1x8x4xbf16>
    %52 = vector.shape_cast %51 : vector<1x8x4xbf16> to vector<8x4xbf16>
    %cst_41 = arith.constant dense<0.000000e+00> : vector<8x512xf32>
    %53 = tpu.matmul %52, %50, %cst_41 {dimension_numbers = #tpu.dot_dimension_numbers<[1], [0], [0], [1], [0, 0, 1, 1], [], []>} : vector<8x4xbf16>, vector<4x512xbf16>, vector<8x512xf32> -> vector<8x512xf32>
    %54 = arith.addf %45, %53 : vector<8x512xf32>
    %c0_42 = arith.constant 0 : index
    %c143 = arith.constant 143 : index
    %55 = vector.load %arg1[%c0_42, %c143] : memref<4x768xbf16, #tpu.memory_space<vmem>>, vector<4x512xbf16>
    %c6 = arith.constant 6 : index
    %c0_43 = arith.constant 0 : index
    %c0_44 = arith.constant 0 : index
    %56 = vector.load %arg3[%c6, %c0_43, %c0_44] : memref<9x1x512xbf16, #tpu.memory_space<vmem>>, vector<1x1x512xbf16>
    %57 = vector.shape_cast %56 : vector<1x1x512xbf16> to vector<1x512xbf16>
    %58 = vector.broadcast %57 : vector<1x512xbf16> to vector<4x512xbf16>
    %59 = arith.mulf %55, %58 : vector<4x512xbf16>
    %c6_45 = arith.constant 6 : index
    %c0_46 = arith.constant 0 : index
    %c0_47 = arith.constant 0 : index
    %60 = vector.load %arg2[%c6_45, %c0_46, %c0_47] : memref<9x8x4xbf16, #tpu.memory_space<vmem>>, vector<1x8x4xbf16>
    %61 = vector.shape_cast %60 : vector<1x8x4xbf16> to vector<8x4xbf16>
    %cst_48 = arith.constant dense<0.000000e+00> : vector<8x512xf32>
    %62 = tpu.matmul %61, %59, %cst_48 {dimension_numbers = #tpu.dot_dimension_numbers<[1], [0], [0], [1], [0, 0, 1, 1], [], []>} : vector<8x4xbf16>, vector<4x512xbf16>, vector<8x512xf32> -> vector<8x512xf32>
    %63 = arith.addf %54, %62 : vector<8x512xf32>
    %c0_49 = arith.constant 0 : index
    %c144 = arith.constant 144 : index
    %64 = vector.load %arg1[%c0_49, %c144] : memref<4x768xbf16, #tpu.memory_space<vmem>>, vector<4x512xbf16>
    %c7 = arith.constant 7 : index
    %c0_50 = arith.constant 0 : index
    %c0_51 = arith.constant 0 : index
    %65 = vector.load %arg3[%c7, %c0_50, %c0_51] : memref<9x1x512xbf16, #tpu.memory_space<vmem>>, vector<1x1x512xbf16>
    %66 = vector.shape_cast %65 : vector<1x1x512xbf16> to vector<1x512xbf16>
    %67 = vector.broadcast %66 : vector<1x512xbf16> to vector<4x512xbf16>
    %68 = arith.mulf %64, %67 : vector<4x512xbf16>
    %c7_52 = arith.constant 7 : index
    %c0_53 = arith.constant 0 : index
    %c0_54 = arith.constant 0 : index
    %69 = vector.load %arg2[%c7_52, %c0_53, %c0_54] : memref<9x8x4xbf16, #tpu.memory_space<vmem>>, vector<1x8x4xbf16>
    %70 = vector.shape_cast %69 : vector<1x8x4xbf16> to vector<8x4xbf16>
    %cst_55 = arith.constant dense<0.000000e+00> : vector<8x512xf32>
    %71 = tpu.matmul %70, %68, %cst_55 {dimension_numbers = #tpu.dot_dimension_numbers<[1], [0], [0], [1], [0, 0, 1, 1], [], []>} : vector<8x4xbf16>, vector<4x512xbf16>, vector<8x512xf32> -> vector<8x512xf32>
    %72 = arith.addf %63, %71 : vector<8x512xf32>
    %c0_56 = arith.constant 0 : index
    %c145 = arith.constant 145 : index
    %73 = vector.load %arg1[%c0_56, %c145] : memref<4x768xbf16, #tpu.memory_space<vmem>>, vector<4x512xbf16>
    %c8 = arith.constant 8 : index
    %c0_57 = arith.constant 0 : index
    %c0_58 = arith.constant 0 : index
    %74 = vector.load %arg3[%c8, %c0_57, %c0_58] : memref<9x1x512xbf16, #tpu.memory_space<vmem>>, vector<1x1x512xbf16>
    %75 = vector.shape_cast %74 : vector<1x1x512xbf16> to vector<1x512xbf16>
    %76 = vector.broadcast %75 : vector<1x512xbf16> to vector<4x512xbf16>
    %77 = arith.mulf %73, %76 : vector<4x512xbf16>
    %c8_59 = arith.constant 8 : index
    %c0_60 = arith.constant 0 : index
    %c0_61 = arith.constant 0 : index
    %78 = vector.load %arg2[%c8_59, %c0_60, %c0_61] : memref<9x8x4xbf16, #tpu.memory_space<vmem>>, vector<1x8x4xbf16>
    %79 = vector.shape_cast %78 : vector<1x8x4xbf16> to vector<8x4xbf16>
    %cst_62 = arith.constant dense<0.000000e+00> : vector<8x512xf32>
    %80 = tpu.matmul %79, %77, %cst_62 {dimension_numbers = #tpu.dot_dimension_numbers<[1], [0], [0], [1], [0, 0, 1, 1], [], []>} : vector<8x4xbf16>, vector<4x512xbf16>, vector<8x512xf32> -> vector<8x512xf32>
    %81 = arith.addf %72, %80 : vector<8x512xf32>
    %c0_63 = arith.constant 0 : index
    %c0_64 = arith.constant 0 : index
    %82 = vector.load %arg4[%c0_63, %c0_64] : memref<8x1xf32, #tpu.memory_space<vmem>>, vector<8x1xf32>
    %83 = vector.broadcast %82 : vector<8x1xf32> to vector<8x512xf32>
    %84 = arith.addf %81, %83 : vector<8x512xf32>
    %85 = vector.extract_strided_slice %84 {offsets = [0, 0], sizes = [8, 256], strides = [1, 1]} : vector<8x512xf32> to vector<8x256xf32>
    %c0_65 = arith.constant 0 : index
    %c0_66 = arith.constant 0 : index
    %c0_67 = arith.constant 0 : index
    %86 = vector.load %arg5[%c0_65, %c0_66, %c0_67] : memref<2x8x256xf32, #tpu.memory_space<vmem>>, vector<1x8x256xf32>
    %87 = vector.shape_cast %86 : vector<1x8x256xf32> to vector<8x256xf32>
    %88 = vector.shape_cast %85 : vector<8x256xf32> to vector<1x8x256xf32>
    tpu.vector_store %arg5[%c0_65, %c0_66, %c0_67], %88 {strides = array<i32>} : memref<2x8x256xf32, #tpu.memory_space<vmem>>, vector<1x8x256xf32>,
    %89 = vector.extract_strided_slice %84 {offsets = [0, 256], sizes = [8, 256], strides = [1, 1]} : vector<8x512xf32> to vector<8x256xf32>
    %c1_68 = arith.constant 1 : index
    %c0_69 = arith.constant 0 : index
    %c0_70 = arith.constant 0 : index
    %90 = vector.load %arg5[%c1_68, %c0_69, %c0_70] : memref<2x8x256xf32, #tpu.memory_space<vmem>>, vector<1x8x256xf32>
    %91 = vector.shape_cast %90 : vector<1x8x256xf32> to vector<8x256xf32>
    %92 = vector.shape_cast %89 : vector<8x256xf32> to vector<1x8x256xf32>
    tpu.vector_store %arg5[%c1_68, %c0_69, %c0_70], %92 {strides = array<i32>} : memref<2x8x256xf32, #tpu.memory_space<vmem>>, vector<1x8x256xf32>,
    return
  }
  func.func @transform_0(%arg0: i32) -> (i32, i32) {
    %c0_i32 = arith.constant 0 : i32
    %c0_i32_0 = arith.constant 0 : i32
    %c0_i32_1 = arith.constant 0 : i32
    return %c0_i32, %c0_i32_0 : i32, i32
  }
  func.func @transform_1(%arg0: i32) -> (i32, i32, i32) {
    %c0_i32 = arith.constant 0 : i32
    %c0_i32_0 = arith.constant 0 : i32
    %c0_i32_1 = arith.constant 0 : i32
    %c0_i32_2 = arith.constant 0 : i32
    return %c0_i32, %c0_i32_0, %c0_i32_1 : i32, i32, i32
  }
  func.func @transform_2(%arg0: i32) -> (i32, i32, i32) {
    %c0_i32 = arith.constant 0 : i32
    %c0_i32_0 = arith.constant 0 : i32
    %c0_i32_1 = arith.constant 0 : i32
    %c0_i32_2 = arith.constant 0 : i32
    return %c0_i32, %c0_i32_0, %c0_i32_1 : i32, i32, i32
  }
  func.func @transform_3(%arg0: i32) -> (i32, i32) {
    %c0_i32 = arith.constant 0 : i32
    %c0_i32_0 = arith.constant 0 : i32
    %c0_i32_1 = arith.constant 0 : i32
    return %c0_i32, %c0_i32_0 : i32, i32
  }
  func.func @transform_4(%arg0: i32) -> (i32, i32, i32) {
    %c0_i32 = arith.constant 0 : i32
    %c0_i32_0 = arith.constant 0 : i32
    %c0_i32_1 = arith.constant 0 : i32
    %c0_i32_2 = arith.constant 0 : i32
    return %c0_i32, %c0_i32_0, %c0_i32_1 : i32, i32, i32
  }
}

</mosaic_0001>

<llo_original>
// kernel: ropconv3_forward.1
$region0: #{ropconv3_forward.1}
  #allocation0 [shape = 'u32[]', space=smem, size = 0x4, offset = 0x4, fixed_abs, tag = 'smem constant byte address 0x4 - core index']
  #allocation1 [shape = 'u32[144,128]{1,0:T(1,128)}', space=vmem, size = 0x12000, scoped, tag = 'internal scratch']
  %s0 = inlined_call_operand.vmem [shape: bf16[4,768], index: 0, kind: input, shape index: {}]
  %s1 = inlined_call_operand.vmem [shape: bf16[9,8,4], index: 1, kind: input, shape index: {}]
  %s2 = inlined_call_operand.vmem [shape: bf16[9,1,512], index: 2, kind: input, shape index: {}]
  %s3 = inlined_call_operand.vmem [shape: f32[8,1], index: 3, kind: input, shape index: {}]
  %s4 = inlined_call_operand.vmem [shape: f32[2,8,256], index: 4, kind: output, shape index: {}]
  %s5 = sld [smem:[#allocation0]]
  $region26: #{ropconv3_forward.1} parent=0
    _
  %s7 = ssub.s32 1, %s5
  %s8 = scalar_select 0, %s7, %s5
  // Predicated region
  $region2: #{ropconv3_forward.1} parent=0 // pred_check
    _
  $region3: #{ropconv3_forward.1} parent=0 // pred_check_branch
    %10 = sbr.rel (0) target = $region5
  $region4: #{ropconv3_forward.1} parent=0 // pred_region
    _
  $region5: #{ropconv3_forward.1} parent=0 // pred_fallthru
    _
  // Predicated region
  $region6: #{ropconv3_forward.1} parent=0 // pred_check
    _
  $region7: #{ropconv3_forward.1} parent=0 // pred_check_branch
    %12 = sbr.rel (0) target = $region9
  $region8: #{ropconv3_forward.1} parent=0 // pred_region
    _
  $region9: #{ropconv3_forward.1} parent=0 // pred_fallthru
    _
  // Predicated region
  $region10: #{ropconv3_forward.1} parent=0 // pred_check
    _
  $region11: #{ropconv3_forward.1} parent=0 // pred_check_branch
    %14 = sbr.rel (0) target = $region13
  $region12: #{ropconv3_forward.1} parent=0 // pred_region
    _
  $region13: #{ropconv3_forward.1} parent=0 // pred_fallthru
    _
  // Predicated region
  $region14: #{ropconv3_forward.1} parent=0 // pred_check
    _
  $region15: #{ropconv3_forward.1} parent=0 // pred_check_branch
    %16 = sbr.rel (0) target = $region17
  $region16: #{ropconv3_forward.1} parent=0 // pred_region
    _
  $region17: #{ropconv3_forward.1} parent=0 // pred_fallthru
    _
  %v18 = vld [vmem:[%s0] sm:$0xff]
  %v19 = vld [vmem:[%s0 + $0x8] sm:$0x3]
  %v20 = vld [vmem:[%s2] sm:$0xf]
  %v23 = vunpack.c.l.s4 1966171168
  %v24 = vunpack.c.0.s8 %v23
  %v25 = vlaneseq
  %v26 = vshrl.u32 %v25, 7
  %v27 = vsub.s32 %v24, %v26
  %v28 = vrot.slane %v20, %v27
  %v29 = vcombine.high %v28, %v28
  %v31 = vunpack.c.l.s4 1966171168
  %v32 = vunpack.c.0.s8 %v31
  %v33 = vlaneseq
  %v34 = vshrl.u32 %v33, 7
  %v35 = vsub.s32 %v32, %v34
  %v36 = vrot.slane %v28, %v35
  %v38 = vunpack.c.l.s4 1966171168
  %v39 = vunpack.c.0.s8 %v38
  %v40 = vlaneseq
  %v41 = vshrl.u32 %v40, 7
  %v42 = vsub.s32 %v39, %v41
  %v43 = vrot.slane %v29, %v42
  %v44 = vcombine.high %v36, %v36
  %v45 = vcombine.high %v43, %v43
  %v47 = vpack.i.b16 %v36, %v36
  %v49 = vlaneseq
  %v50 = vshrl.u32 %v49, 7
  %v51 = vsub.s32 0, %v50
  %v52 = vrot.slane %v47, %v51
  %v54 = vpack.i.b16 %v43, %v43
  %v56 = vlaneseq
  %v57 = vshrl.u32 %v56, 7
  %v58 = vsub.s32 0, %v57
  %v59 = vrot.slane %v54, %v58
  %v61 = vpack.i.b16 %v44, %v44
  %v63 = vlaneseq
  %v64 = vshrl.u32 %v63, 7
  %v65 = vsub.s32 0, %v64
  %v66 = vrot.slane %v61, %v65
  %v68 = vpack.i.b16 %v45, %v45
  %v70 = vlaneseq
  %v71 = vshrl.u32 %v70, 7
  %v72 = vsub.s32 0, %v71
  %v73 = vrot.slane %v68, %v72
  %v78 = vcombine.low %v52, %v59
  %v79 = vcombine.low %v66, %v73
  %v81 = vunpack.c.l.s4 1983009808
  %v82 = vunpack.c.0.s8 %v81
  %v83 = vlaneseq
  %v84 = vshrl.u32 %v83, 7
  %v85 = vsub.s32 %v82, %v84
  %v86 = vrot.slane %v78, %v85
  %v88 = vunpack.c.l.s4 1983009808
  %v89 = vunpack.c.0.s8 %v88
  %v90 = vlaneseq
  %v91 = vshrl.u32 %v90, 7
  %v92 = vsub.s32 %v89, %v91
  %v93 = vrot.slane %v79, %v92
  %v94 = vcombine.low %v86, %v93
  %95 = vrot.lane.b32.xlu0 %v94, 111
  %v96 = vpop.permute.xlu0 %95
  %v97 = vrot.slane %v96, 6
  %vm98 = vcmask 908288
  %v99 = vsel %vm98, %v97, %v96
  %v102 = vmul.bf16 %v18, %v99
  %v103 = vmul.bf16 %v19, %v97
  %v104 = vld [vmem:[%s1] sm:$0xf]
  %s105 = scalar_lea.vmem %s2, 4
  %v106 = vld [vmem:[%s105] sm:$0xf]
  %v109 = vunpack.c.l.s4 1966171168
  %v110 = vunpack.c.0.s8 %v109
  %v111 = vlaneseq
  %v112 = vshrl.u32 %v111, 7
  %v113 = vsub.s32 %v110, %v112
  %v114 = vrot.slane %v106, %v113
  %v115 = vcombine.high %v114, %v114
  %v117 = vunpack.c.l.s4 1966171168
  %v118 = vunpack.c.0.s8 %v117
  %v119 = vlaneseq
  %v120 = vshrl.u32 %v119, 7
  %v121 = vsub.s32 %v118, %v120
  %v122 = vrot.slane %v114, %v121
  %v124 = vunpack.c.l.s4 1966171168
  %v125 = vunpack.c.0.s8 %v124
  %v126 = vlaneseq
  %v127 = vshrl.u32 %v126, 7
  %v128 = vsub.s32 %v125, %v127
  %v129 = vrot.slane %v115, %v128
  %v130 = vcombine.high %v122, %v122
  %v131 = vcombine.high %v129, %v129
  %v133 = vpack.i.b16 %v122, %v122
  %v135 = vlaneseq
  %v136 = vshrl.u32 %v135, 7
  %v137 = vsub.s32 0, %v136
  %v138 = vrot.slane %v133, %v137
  %v140 = vpack.i.b16 %v129, %v129
  %v142 = vlaneseq
  %v143 = vshrl.u32 %v142, 7
  %v144 = vsub.s32 0, %v143
  %v145 = vrot.slane %v140, %v144
  %v147 = vpack.i.b16 %v130, %v130
  %v149 = vlaneseq
  %v150 = vshrl.u32 %v149, 7
  %v151 = vsub.s32 0, %v150
  %v152 = vrot.slane %v147, %v151
  %v154 = vpack.i.b16 %v131, %v131
  %v156 = vlaneseq
  %v157 = vshrl.u32 %v156, 7
  %v158 = vsub.s32 0, %v157
  %v159 = vrot.slane %v154, %v158
  %v164 = vcombine.low %v138, %v145
  %v165 = vcombine.low %v152, %v159
  %v167 = vunpack.c.l.s4 1983009808
  %v168 = vunpack.c.0.s8 %v167
  %v169 = vlaneseq
  %v170 = vshrl.u32 %v169, 7
  %v171 = vsub.s32 %v168, %v170
  %v172 = vrot.slane %v164, %v171
  %v174 = vunpack.c.l.s4 1983009808
  %v175 = vunpack.c.0.s8 %v174
  %v176 = vlaneseq
  %v177 = vshrl.u32 %v176, 7
  %v178 = vsub.s32 %v175, %v177
  %v179 = vrot.slane %v165, %v178
  %v180 = vcombine.low %v172, %v179
  %181 = vrot.lane.b32.xlu0 %v180, 112
  %v182 = vpop.permute.xlu0 %181
  %v183 = vrot.slane %v182, 6
  %vm184 = vcmask 916480
  %v185 = vsel %vm184, %v183, %v182
  %v188 = vmul.bf16 %v18, %v185
  %v189 = vmul.bf16 %v19, %v183
  %s190 = scalar_lea.vmem %s1, 4
  %v191 = vld [vmem:[%s190] sm:$0xf]
  %v194 = vcombine.high %v188, %v188
  %v196 = vunpack.c.l.s4 1983009808
  %v197 = vunpack.c.0.s8 %v196
  %v198 = vlaneseq
  %v199 = vshrl.u32 %v198, 7
  %v200 = vsub.s32 %v197, %v199
  %v201 = vrot.slane %v188, %v200
  %v203 = vunpack.c.l.s4 1983009808
  %v204 = vunpack.c.0.s8 %v203
  %v205 = vlaneseq
  %v206 = vshrl.u32 %v205, 7
  %v207 = vsub.s32 %v204, %v206
  %v208 = vrot.slane %v194, %v207
  %v209 = vcombine.high %v201, %v201
  %v210 = vcombine.high %v208, %v208
  %v212 = vunpack.c.l.s4 1983009808
  %v213 = vunpack.c.0.s8 %v212
  %v214 = vlaneseq
  %v215 = vshrl.u32 %v214, 7
  %v216 = vsub.s32 %v213, %v215
  %v217 = vrot.slane %v189, %v216
  %218 = vrot.lane.b32.xlu0 %v201, 16
  %v219 = vpop.permute.xlu0 %218
  %220 = vrot.lane.b32.xlu0 %v209, 16
  %v221 = vpop.permute.xlu0 %220
  %222 = vrot.lane.b32.xlu0 %v208, 16
  %v223 = vpop.permute.xlu0 %222
  %224 = vrot.lane.b32.xlu0 %v210, 16
  %v225 = vpop.permute.xlu0 %224
  %226 = vrot.lane.b32.xlu0 %v217, 16
  %v227 = vpop.permute.xlu0 %226
  %vm228 = vcmask 130048
  %v229 = vsel %vm228, %v219, %v221
  %v230 = vsel %vm228, %v221, %v223
  %v231 = vsel %vm228, %v223, %v225
  %v232 = vsel %vm228, %v225, %v227
  %vm233 = vcmask 31744
  %v235 = vsel %vm233, %v191, 0
  %vm237 = vcmask 1041408
  %v239 = vsel %vm237, %v229, 0
  %v242 = vsel %vm237, %v230, 0
  %v245 = vsel %vm237, %v231, 0
  %v248 = vsel %vm237, %v232, 0
  %250 = vmatprep.subr.bf16.mxu0 0
  %251 = vmatpush1.bf16.msra.mxu0 0
  %252 = vmatprep.subr.bf16.mxu0 0
  %253 = vmatpush1.bf16.msra.mxu0 0
  %254 = vmatprep.subr.bf16.mxu0 0
  %255 = vmatpush1.bf16.msra.mxu0 0
  %256 = vmatprep.subr.bf16.mxu0 0
  %257 = vmatpush1.bf16.msra.mxu0 0
  %258 = vmatprep.subr.bf16.mxu0 0
  %259 = vmatpush1.bf16.msra.mxu0 0
  %260 = vmatprep.subr.bf16.mxu0 0
  %261 = vmatpush1.bf16.msra.mxu0 0
  %262 = vmatprep.subr.bf16.mxu0 0
  %263 = vmatpush1.bf16.msra.mxu0 0
  %264 = vmatprep.subr.bf16.mxu0 %v242
  %265 = vmatpush1.bf16.msra.mxu0 %v239
  %266 = vmatprep.subr.bf16.mxu0 0
  %267 = vmatpush2.bf16.msra.mxu0 0
  %268 = vmatprep.subr.bf16.mxu0 0
  %269 = vmatpush2.bf16.msra.mxu0 0
  %270 = vmatprep.subr.bf16.mxu0 0
  %271 = vmatpush2.bf16.msra.mxu0 0
  %272 = vmatprep.subr.bf16.mxu0 0
  %273 = vmatpush2.bf16.msra.mxu0 0
  %274 = vmatprep.subr.bf16.mxu0 0
  %275 = vmatpush2.bf16.msra.mxu0 0
  %276 = vmatprep.subr.bf16.mxu0 0
  %277 = vmatpush2.bf16.msra.mxu0 0
  %278 = vmatprep.subr.bf16.mxu0 0
  %279 = vmatpush2.bf16.msra.mxu0 0
  %280 = vmatprep.subr.bf16.mxu0 0
  %281 = vmatpush2.bf16.msra.mxu0 0
  %282 = vmatprep.mubr.bf16.mxu0 0
  %283 = vmatmul.mubr.bf16.gmra.mxu0 %v235
  %v284 = vpop.f32.mrf.mxu0
  %v285 = vadd.f32 0.0, %v284
  %v286 = vpop.f32.mrf.mxu0
  %v287 = vadd.f32 0.0, %v286
  %v288 = vpop.f32.mrf.mxu0
  %v289 = vpop.f32.mrf.mxu0
  %290 = vdwg.mxu0
  %291 = vmatprep.subr.bf16.mxu0 0
  %292 = vmatpush1.bf16.msra.mxu0 0
  %293 = vmatprep.subr.bf16.mxu0 0
  %294 = vmatpush1.bf16.msra.mxu0 0
  %295 = vmatprep.subr.bf16.mxu0 0
  %296 = vmatpush1.bf16.msra.mxu0 0
  %297 = vmatprep.subr.bf16.mxu0 0
  %298 = vmatpush1.bf16.msra.mxu0 0
  %299 = vmatprep.subr.bf16.mxu0 0
  %300 = vmatpush1.bf16.msra.mxu0 0
  %301 = vmatprep.subr.bf16.mxu0 0
  %302 = vmatpush1.bf16.msra.mxu0 0
  %303 = vmatprep.subr.bf16.mxu0 0
  %304 = vmatpush1.bf16.msra.mxu0 0
  %305 = vmatprep.subr.bf16.mxu0 %v248
  %306 = vmatpush1.bf16.msra.mxu0 %v245
  %307 = vmatprep.subr.bf16.mxu0 0
  %308 = vmatpush2.bf16.msra.mxu0 0
  %309 = vmatprep.subr.bf16.mxu0 0
  %310 = vmatpush2.bf16.msra.mxu0 0
  %311 = vmatprep.subr.bf16.mxu0 0
  %312 = vmatpush2.bf16.msra.mxu0 0
  %313 = vmatprep.subr.bf16.mxu0 0
  %314 = vmatpush2.bf16.msra.mxu0 0
  %315 = vmatprep.subr.bf16.mxu0 0
  %316 = vmatpush2.bf16.msra.mxu0 0
  %317 = vmatprep.subr.bf16.mxu0 0
  %318 = vmatpush2.bf16.msra.mxu0 0
  %319 = vmatprep.subr.bf16.mxu0 0
  %320 = vmatpush2.bf16.msra.mxu0 0
  %321 = vmatprep.subr.bf16.mxu0 0
  %322 = vmatpush2.bf16.msra.mxu0 0
  %323 = vmatprep.mubr.bf16.mxu0 0
  %324 = vmatmul.mubr.bf16.gmra.mxu0 %v235
  %v325 = vpop.f32.mrf.mxu0
  %v326 = vadd.f32 0.0, %v325
  %v327 = vpop.f32.mrf.mxu0
  %v328 = vadd.f32 0.0, %v327
  %v329 = vpop.f32.mrf.mxu0
  %v330 = vpop.f32.mrf.mxu0
  %331 = vdwg.mxu0
  %v334 = vcombine.high %v102, %v102
  %v336 = vunpack.c.l.s4 1983009808
  %v337 = vunpack.c.0.s8 %v336
  %v338 = vlaneseq
  %v339 = vshrl.u32 %v338, 7
  %v340 = vsub.s32 %v337, %v339
  %v341 = vrot.slane %v102, %v340
  %v343 = vunpack.c.l.s4 1983009808
  %v344 = vunpack.c.0.s8 %v343
  %v345 = vlaneseq
  %v346 = vshrl.u32 %v345, 7
  %v347 = vsub.s32 %v344, %v346
  %v348 = vrot.slane %v334, %v347
  %v349 = vcombine.high %v341, %v341
  %v350 = vcombine.high %v348, %v348
  %v352 = vunpack.c.l.s4 1983009808
  %v353 = vunpack.c.0.s8 %v352
  %v354 = vlaneseq
  %v355 = vshrl.u32 %v354, 7
  %v356 = vsub.s32 %v353, %v355
  %v357 = vrot.slane %v103, %v356
  %358 = vrot.lane.b32.xlu0 %v341, 17
  %v359 = vpop.permute.xlu0 %358
  %360 = vrot.lane.b32.xlu0 %v349, 17
  %v361 = vpop.permute.xlu0 %360
  %362 = vrot.lane.b32.xlu0 %v348, 17
  %v363 = vpop.permute.xlu0 %362
  %364 = vrot.lane.b32.xlu0 %v350, 17
  %v365 = vpop.permute.xlu0 %364
  %366 = vrot.lane.b32.xlu0 %v357, 17
  %v367 = vpop.permute.xlu0 %366
  %vm368 = vcmask 138240
  %v369 = vsel %vm368, %v359, %v361
  %v370 = vsel %vm368, %v361, %v363
  %v371 = vsel %vm368, %v363, %v365
  %v372 = vsel %vm368, %v365, %v367
  %v374 = vsel %vm233, %v104, 0
  %v377 = vsel %vm237, %v369, 0
  %v380 = vsel %vm237, %v370, 0
  %v383 = vsel %vm237, %v371, 0
  %v386 = vsel %vm237, %v372, 0
  %388 = vmatprep.subr.bf16.mxu0 0
  %389 = vmatpush1.bf16.msra.mxu0 0
  %390 = vmatprep.subr.bf16.mxu0 0
  %391 = vmatpush1.bf16.msra.mxu0 0
  %392 = vmatprep.subr.bf16.mxu0 0
  %393 = vmatpush1.bf16.msra.mxu0 0
  %394 = vmatprep.subr.bf16.mxu0 0
  %395 = vmatpush1.bf16.msra.mxu0 0
  %396 = vmatprep.subr.bf16.mxu0 0
  %397 = vmatpush1.bf16.msra.mxu0 0
  %398 = vmatprep.subr.bf16.mxu0 0
  %399 = vmatpush1.bf16.msra.mxu0 0
  %400 = vmatprep.subr.bf16.mxu0 0
  %401 = vmatpush1.bf16.msra.mxu0 0
  %402 = vmatprep.subr.bf16.mxu0 %v380
  %403 = vmatpush1.bf16.msra.mxu0 %v377
  %404 = vmatprep.subr.bf16.mxu0 0
  %405 = vmatpush2.bf16.msra.mxu0 0
  %406 = vmatprep.subr.bf16.mxu0 0
  %407 = vmatpush2.bf16.msra.mxu0 0
  %408 = vmatprep.subr.bf16.mxu0 0
  %409 = vmatpush2.bf16.msra.mxu0 0
  %410 = vmatprep.subr.bf16.mxu0 0
  %411 = vmatpush2.bf16.msra.mxu0 0
  %412 = vmatprep.subr.bf16.mxu0 0
  %413 = vmatpush2.bf16.msra.mxu0 0
  %414 = vmatprep.subr.bf16.mxu0 0
  %415 = vmatpush2.bf16.msra.mxu0 0
  %416 = vmatprep.subr.bf16.mxu0 0
  %417 = vmatpush2.bf16.msra.mxu0 0
  %418 = vmatprep.subr.bf16.mxu0 0
  %419 = vmatpush2.bf16.msra.mxu0 0
  %420 = vmatprep.mubr.bf16.mxu0 0
  %421 = vmatmul.mubr.bf16.gmra.mxu0 %v374
  %v422 = vpop.f32.mrf.mxu0
  %v423 = vadd.f32 %v285, %v422
  %v424 = vpop.f32.mrf.mxu0
  %v425 = vadd.f32 %v287, %v424
  %v426 = vpop.f32.mrf.mxu0
  %v427 = vpop.f32.mrf.mxu0
  %428 = vdwg.mxu0
  %429 = vmatprep.subr.bf16.mxu0 0
  %430 = vmatpush1.bf16.msra.mxu0 0
  %431 = vmatprep.subr.bf16.mxu0 0
  %432 = vmatpush1.bf16.msra.mxu0 0
  %433 = vmatprep.subr.bf16.mxu0 0
  %434 = vmatpush1.bf16.msra.mxu0 0
  %435 = vmatprep.subr.bf16.mxu0 0
  %436 = vmatpush1.bf16.msra.mxu0 0
  %437 = vmatprep.subr.bf16.mxu0 0
  %438 = vmatpush1.bf16.msra.mxu0 0
  %439 = vmatprep.subr.bf16.mxu0 0
  %440 = vmatpush1.bf16.msra.mxu0 0
  %441 = vmatprep.subr.bf16.mxu0 0
  %442 = vmatpush1.bf16.msra.mxu0 0
  %443 = vmatprep.subr.bf16.mxu0 %v386
  %444 = vmatpush1.bf16.msra.mxu0 %v383
  %445 = vmatprep.subr.bf16.mxu0 0
  %446 = vmatpush2.bf16.msra.mxu0 0
  %447 = vmatprep.subr.bf16.mxu0 0
  %448 = vmatpush2.bf16.msra.mxu0 0
  %449 = vmatprep.subr.bf16.mxu0 0
  %450 = vmatpush2.bf16.msra.mxu0 0
  %451 = vmatprep.subr.bf16.mxu0 0
  %452 = vmatpush2.bf16.msra.mxu0 0
  %453 = vmatprep.subr.bf16.mxu0 0
  %454 = vmatpush2.bf16.msra.mxu0 0
  %455 = vmatprep.subr.bf16.mxu0 0
  %456 = vmatpush2.bf16.msra.mxu0 0
  %457 = vmatprep.subr.bf16.mxu0 0
  %458 = vmatpush2.bf16.msra.mxu0 0
  %459 = vmatprep.subr.bf16.mxu0 0
  %460 = vmatpush2.bf16.msra.mxu0 0
  %461 = vmatprep.mubr.bf16.mxu0 0
  %462 = vmatmul.mubr.bf16.gmra.mxu0 %v374
  %v463 = vpop.f32.mrf.mxu0
  %v464 = vadd.f32 %v326, %v463
  %v465 = vpop.f32.mrf.mxu0
  %v466 = vadd.f32 %v328, %v465
  %v467 = vpop.f32.mrf.mxu0
  %v468 = vpop.f32.mrf.mxu0
  %469 = vdwg.mxu0
  %v470 = vld [vmem:[%s0] sm:$0xff]
  %v471 = vld [vmem:[%s0 + $0x8] sm:$0x3]
  %s472 = scalar_lea.vmem %s2, 8
  %v473 = vld [vmem:[%s472] sm:$0xf]
  %v476 = vunpack.c.l.s4 1966171168
  %v477 = vunpack.c.0.s8 %v476
  %v478 = vlaneseq
  %v479 = vshrl.u32 %v478, 7
  %v480 = vsub.s32 %v477, %v479
  %v481 = vrot.slane %v473, %v480
  %v482 = vcombine.high %v481, %v481
  %v484 = vunpack.c.l.s4 1966171168
  %v485 = vunpack.c.0.s8 %v484
  %v486 = vlaneseq
  %v487 = vshrl.u32 %v486, 7
  %v488 = vsub.s32 %v485, %v487
  %v489 = vrot.slane %v481, %v488
  %v491 = vunpack.c.l.s4 1966171168
  %v492 = vunpack.c.0.s8 %v491
  %v493 = vlaneseq
  %v494 = vshrl.u32 %v493, 7
  %v495 = vsub.s32 %v492, %v494
  %v496 = vrot.slane %v482, %v495
  %v497 = vcombine.high %v489, %v489
  %v498 = vcombine.high %v496, %v496
  %v500 = vpack.i.b16 %v489, %v489
  %v502 = vlaneseq
  %v503 = vshrl.u32 %v502, 7
  %v504 = vsub.s32 0, %v503
  %v505 = vrot.slane %v500, %v504
  %v507 = vpack.i.b16 %v496, %v496
  %v509 = vlaneseq
  %v510 = vshrl.u32 %v509, 7
  %v511 = vsub.s32 0, %v510
  %v512 = vrot.slane %v507, %v511
  %v514 = vpack.i.b16 %v497, %v497
  %v516 = vlaneseq
  %v517 = vshrl.u32 %v516, 7
  %v518 = vsub.s32 0, %v517
  %v519 = vrot.slane %v514, %v518
  %v521 = vpack.i.b16 %v498, %v498
  %v523 = vlaneseq
  %v524 = vshrl.u32 %v523, 7
  %v525 = vsub.s32 0, %v524
  %v526 = vrot.slane %v521, %v525
  %v531 = vcombine.low %v505, %v512
  %v532 = vcombine.low %v519, %v526
  %v534 = vunpack.c.l.s4 1983009808
  %v535 = vunpack.c.0.s8 %v534
  %v536 = vlaneseq
  %v537 = vshrl.u32 %v536, 7
  %v538 = vsub.s32 %v535, %v537
  %v539 = vrot.slane %v531, %v538
  %v541 = vunpack.c.l.s4 1983009808
  %v542 = vunpack.c.0.s8 %v541
  %v543 = vlaneseq
  %v544 = vshrl.u32 %v543, 7
  %v545 = vsub.s32 %v542, %v544
  %v546 = vrot.slane %v532, %v545
  %v547 = vcombine.low %v539, %v546
  %548 = vrot.lane.b32.xlu0 %v547, 113
  %v549 = vpop.permute.xlu0 %548
  %v550 = vrot.slane %v549, 6
  %vm551 = vcmask 924672
  %v552 = vsel %vm551, %v550, %v549
  %v555 = vmul.bf16 %v470, %v552
  %v556 = vmul.bf16 %v471, %v550
  %s557 = scalar_lea.vmem %s1, 8
  %v558 = vld [vmem:[%s557] sm:$0xf]
  %v561 = vcombine.high %v555, %v555
  %v563 = vunpack.c.l.s4 1983009808
  %v564 = vunpack.c.0.s8 %v563
  %v565 = vlaneseq
  %v566 = vshrl.u32 %v565, 7
  %v567 = vsub.s32 %v564, %v566
  %v568 = vrot.slane %v555, %v567
  %v570 = vunpack.c.l.s4 1983009808
  %v571 = vunpack.c.0.s8 %v570
  %v572 = vlaneseq
  %v573 = vshrl.u32 %v572, 7
  %v574 = vsub.s32 %v571, %v573
  %v575 = vrot.slane %v561, %v574
  %v576 = vcombine.high %v568, %v568
  %v577 = vcombine.high %v575, %v575
  %v579 = vunpack.c.l.s4 1983009808
  %v580 = vunpack.c.0.s8 %v579
  %v581 = vlaneseq
  %v582 = vshrl.u32 %v581, 7
  %v583 = vsub.s32 %v580, %v582
  %v584 = vrot.slane %v556, %v583
  %585 = vrot.lane.b32.xlu0 %v568, 15
  %v586 = vpop.permute.xlu0 %585
  %587 = vrot.lane.b32.xlu0 %v576, 15
  %v588 = vpop.permute.xlu0 %587
  %589 = vrot.lane.b32.xlu0 %v575, 15
  %v590 = vpop.permute.xlu0 %589
  %591 = vrot.lane.b32.xlu0 %v577, 15
  %v592 = vpop.permute.xlu0 %591
  %593 = vrot.lane.b32.xlu0 %v584, 15
  %v594 = vpop.permute.xlu0 %593
  %vm595 = vcmask 121856
  %v596 = vsel %vm595, %v586, %v588
  %v597 = vsel %vm595, %v588, %v590
  %v598 = vsel %vm595, %v590, %v592
  %v599 = vsel %vm595, %v592, %v594
  %v601 = vsel %vm233, %v558, 0
  %v604 = vsel %vm237, %v596, 0
  %v607 = vsel %vm237, %v597, 0
  %v610 = vsel %vm237, %v598, 0
  %v613 = vsel %vm237, %v599, 0
  %615 = vmatprep.subr.bf16.mxu0 0
  %616 = vmatpush1.bf16.msra.mxu0 0
  %617 = vmatprep.subr.bf16.mxu0 0
  %618 = vmatpush1.bf16.msra.mxu0 0
  %619 = vmatprep.subr.bf16.mxu0 0
  %620 = vmatpush1.bf16.msra.mxu0 0
  %621 = vmatprep.subr.bf16.mxu0 0
  %622 = vmatpush1.bf16.msra.mxu0 0
  %623 = vmatprep.subr.bf16.mxu0 0
  %624 = vmatpush1.bf16.msra.mxu0 0
  %625 = vmatprep.subr.bf16.mxu0 0
  %626 = vmatpush1.bf16.msra.mxu0 0
  %627 = vmatprep.subr.bf16.mxu0 0
  %628 = vmatpush1.bf16.msra.mxu0 0
  %629 = vmatprep.subr.bf16.mxu0 %v607
  %630 = vmatpush1.bf16.msra.mxu0 %v604
  %631 = vmatprep.subr.bf16.mxu0 0
  %632 = vmatpush2.bf16.msra.mxu0 0
  %633 = vmatprep.subr.bf16.mxu0 0
  %634 = vmatpush2.bf16.msra.mxu0 0
  %635 = vmatprep.subr.bf16.mxu0 0
  %636 = vmatpush2.bf16.msra.mxu0 0
  %637 = vmatprep.subr.bf16.mxu0 0
  %638 = vmatpush2.bf16.msra.mxu0 0
  %639 = vmatprep.subr.bf16.mxu0 0
  %640 = vmatpush2.bf16.msra.mxu0 0
  %641 = vmatprep.subr.bf16.mxu0 0
  %642 = vmatpush2.bf16.msra.mxu0 0
  %643 = vmatprep.subr.bf16.mxu0 0
  %644 = vmatpush2.bf16.msra.mxu0 0
  %645 = vmatprep.subr.bf16.mxu0 0
  %646 = vmatpush2.bf16.msra.mxu0 0
  %647 = vmatprep.mubr.bf16.mxu0 0
  %648 = vmatmul.mubr.bf16.gmra.mxu0 %v601
  %v649 = vpop.f32.mrf.mxu0
  %v650 = vadd.f32 0.0, %v649
  %v651 = vpop.f32.mrf.mxu0
  %v652 = vadd.f32 0.0, %v651
  %v653 = vpop.f32.mrf.mxu0
  %v654 = vpop.f32.mrf.mxu0
  %655 = vdwg.mxu0
  %656 = vmatprep.subr.bf16.mxu0 0
  %657 = vmatpush1.bf16.msra.mxu0 0
  %658 = vmatprep.subr.bf16.mxu0 0
  %659 = vmatpush1.bf16.msra.mxu0 0
  %660 = vmatprep.subr.bf16.mxu0 0
  %661 = vmatpush1.bf16.msra.mxu0 0
  %662 = vmatprep.subr.bf16.mxu0 0
  %663 = vmatpush1.bf16.msra.mxu0 0
  %664 = vmatprep.subr.bf16.mxu0 0
  %665 = vmatpush1.bf16.msra.mxu0 0
  %666 = vmatprep.subr.bf16.mxu0 0
  %667 = vmatpush1.bf16.msra.mxu0 0
  %668 = vmatprep.subr.bf16.mxu0 0
  %669 = vmatpush1.bf16.msra.mxu0 0
  %670 = vmatprep.subr.bf16.mxu0 %v613
  %671 = vmatpush1.bf16.msra.mxu0 %v610
  %672 = vmatprep.subr.bf16.mxu0 0
  %673 = vmatpush2.bf16.msra.mxu0 0
  %674 = vmatprep.subr.bf16.mxu0 0
  %675 = vmatpush2.bf16.msra.mxu0 0
  %676 = vmatprep.subr.bf16.mxu0 0
  %677 = vmatpush2.bf16.msra.mxu0 0
  %678 = vmatprep.subr.bf16.mxu0 0
  %679 = vmatpush2.bf16.msra.mxu0 0
  %680 = vmatprep.subr.bf16.mxu0 0
  %681 = vmatpush2.bf16.msra.mxu0 0
  %682 = vmatprep.subr.bf16.mxu0 0
  %683 = vmatpush2.bf16.msra.mxu0 0
  %684 = vmatprep.subr.bf16.mxu0 0
  %685 = vmatpush2.bf16.msra.mxu0 0
  %686 = vmatprep.subr.bf16.mxu0 0
  %687 = vmatpush2.bf16.msra.mxu0 0
  %688 = vmatprep.mubr.bf16.mxu0 0
  %689 = vmatmul.mubr.bf16.gmra.mxu0 %v601
  %v690 = vpop.f32.mrf.mxu0
  %v691 = vadd.f32 0.0, %v690
  %v692 = vpop.f32.mrf.mxu0
  %v693 = vadd.f32 0.0, %v692
  %v694 = vpop.f32.mrf.mxu0
  %v695 = vpop.f32.mrf.mxu0
  %696 = vdwg.mxu0
  %v697 = vadd.f32 %v423, %v650
  %v698 = vadd.f32 %v425, %v652
  %v699 = vadd.f32 %v464, %v691
  %v700 = vadd.f32 %v466, %v693
  %v701 = vld [vmem:[%s0] sm:$0xff]
  %v702 = vld [vmem:[%s0 + $0x8] sm:$0x3]
  %s703 = scalar_lea.vmem %s2, 12
  %v704 = vld [vmem:[%s703] sm:$0xf]
  %v707 = vunpack.c.l.s4 1966171168
  %v708 = vunpack.c.0.s8 %v707
  %v709 = vlaneseq
  %v710 = vshrl.u32 %v709, 7
  %v711 = vsub.s32 %v708, %v710
  %v712 = vrot.slane %v704, %v711
  %v713 = vcombine.high %v712, %v712
  %v715 = vunpack.c.l.s4 1966171168
  %v716 = vunpack.c.0.s8 %v715
  %v717 = vlaneseq
  %v718 = vshrl.u32 %v717, 7
  %v719 = vsub.s32 %v716, %v718
  %v720 = vrot.slane %v712, %v719
  %v722 = vunpack.c.l.s4 1966171168
  %v723 = vunpack.c.0.s8 %v722
  %v724 = vlaneseq
  %v725 = vshrl.u32 %v724, 7
  %v726 = vsub.s32 %v723, %v725
  %v727 = vrot.slane %v713, %v726
  %v728 = vcombine.high %v720, %v720
  %v729 = vcombine.high %v727, %v727
  %v731 = vpack.i.b16 %v720, %v720
  %v733 = vlaneseq
  %v734 = vshrl.u32 %v733, 7
  %v735 = vsub.s32 0, %v734
  %v736 = vrot.slane %v731, %v735
  %v738 = vpack.i.b16 %v727, %v727
  %v740 = vlaneseq
  %v741 = vshrl.u32 %v740, 7
  %v742 = vsub.s32 0, %v741
  %v743 = vrot.slane %v738, %v742
  %v745 = vpack.i.b16 %v728, %v728
  %v747 = vlaneseq
  %v748 = vshrl.u32 %v747, 7
  %v749 = vsub.s32 0, %v748
  %v750 = vrot.slane %v745, %v749
  %v752 = vpack.i.b16 %v729, %v729
  %v754 = vlaneseq
  %v755 = vshrl.u32 %v754, 7
  %v756 = vsub.s32 0, %v755
  %v757 = vrot.slane %v752, %v756
  %v762 = vcombine.low %v736, %v743
  %v763 = vcombine.low %v750, %v757
  %v765 = vunpack.c.l.s4 1983009808
  %v766 = vunpack.c.0.s8 %v765
  %v767 = vlaneseq
  %v768 = vshrl.u32 %v767, 7
  %v769 = vsub.s32 %v766, %v768
  %v770 = vrot.slane %v762, %v769
  %v772 = vunpack.c.l.s4 1983009808
  %v773 = vunpack.c.0.s8 %v772
  %v774 = vlaneseq
  %v775 = vshrl.u32 %v774, 7
  %v776 = vsub.s32 %v773, %v775
  %v777 = vrot.slane %v763, %v776
  %v778 = vcombine.low %v770, %v777
  %779 = vrot.lane.b32.xlu0 %v778, 127
  %v780 = vpop.permute.xlu0 %779
  %v781 = vrot.slane %v780, 6
  %vm782 = vcmask 1039360
  %v783 = vsel %vm782, %v781, %v780
  %v786 = vmul.bf16 %v701, %v783
  %v787 = vmul.bf16 %v702, %v781
  %s788 = scalar_lea.vmem %s1, 12
  %v789 = vld [vmem:[%s788] sm:$0xf]
  %v792 = vcombine.high %v786, %v786
  %v794 = vunpack.c.l.s4 1983009808
  %v795 = vunpack.c.0.s8 %v794
  %v796 = vlaneseq
  %v797 = vshrl.u32 %v796, 7
  %v798 = vsub.s32 %v795, %v797
  %v799 = vrot.slane %v786, %v798
  %v801 = vunpack.c.l.s4 1983009808
  %v802 = vunpack.c.0.s8 %v801
  %v803 = vlaneseq
  %v804 = vshrl.u32 %v803, 7
  %v805 = vsub.s32 %v802, %v804
  %v806 = vrot.slane %v792, %v805
  %v807 = vcombine.high %v799, %v799
  %v808 = vcombine.high %v806, %v806
  %v810 = vunpack.c.l.s4 1983009808
  %v811 = vunpack.c.0.s8 %v810
  %v812 = vlaneseq
  %v813 = vshrl.u32 %v812, 7
  %v814 = vsub.s32 %v811, %v813
  %v815 = vrot.slane %v787, %v814
  %816 = vrot.lane.b32.xlu0 %v799, 1
  %v817 = vpop.permute.xlu0 %816
  %818 = vrot.lane.b32.xlu0 %v807, 1
  %v819 = vpop.permute.xlu0 %818
  %820 = vrot.lane.b32.xlu0 %v806, 1
  %v821 = vpop.permute.xlu0 %820
  %822 = vrot.lane.b32.xlu0 %v808, 1
  %v823 = vpop.permute.xlu0 %822
  %824 = vrot.lane.b32.xlu0 %v815, 1
  %v825 = vpop.permute.xlu0 %824
  %vm826 = vcmask 7168
  %v827 = vsel %vm826, %v817, %v819
  %v828 = vsel %vm826, %v819, %v821
  %v829 = vsel %vm826, %v821, %v823
  %v830 = vsel %vm826, %v823, %v825
  %v832 = vsel %vm233, %v789, 0
  %v835 = vsel %vm237, %v827, 0
  %v838 = vsel %vm237, %v828, 0
  %v841 = vsel %vm237, %v829, 0
  %v844 = vsel %vm237, %v830, 0
  %846 = vmatprep.subr.bf16.mxu0 0
  %847 = vmatpush1.bf16.msra.mxu0 0
  %848 = vmatprep.subr.bf16.mxu0 0
  %849 = vmatpush1.bf16.msra.mxu0 0
  %850 = vmatprep.subr.bf16.mxu0 0
  %851 = vmatpush1.bf16.msra.mxu0 0
  %852 = vmatprep.subr.bf16.mxu0 0
  %853 = vmatpush1.bf16.msra.mxu0 0
  %854 = vmatprep.subr.bf16.mxu0 0
  %855 = vmatpush1.bf16.msra.mxu0 0
  %856 = vmatprep.subr.bf16.mxu0 0
  %857 = vmatpush1.bf16.msra.mxu0 0
  %858 = vmatprep.subr.bf16.mxu0 0
  %859 = vmatpush1.bf16.msra.mxu0 0
  %860 = vmatprep.subr.bf16.mxu0 %v838
  %861 = vmatpush1.bf16.msra.mxu0 %v835
  %862 = vmatprep.subr.bf16.mxu0 0
  %863 = vmatpush2.bf16.msra.mxu0 0
  %864 = vmatprep.subr.bf16.mxu0 0
  %865 = vmatpush2.bf16.msra.mxu0 0
  %866 = vmatprep.subr.bf16.mxu0 0
  %867 = vmatpush2.bf16.msra.mxu0 0
  %868 = vmatprep.subr.bf16.mxu0 0
  %869 = vmatpush2.bf16.msra.mxu0 0
  %870 = vmatprep.subr.bf16.mxu0 0
  %871 = vmatpush2.bf16.msra.mxu0 0
  %872 = vmatprep.subr.bf16.mxu0 0
  %873 = vmatpush2.bf16.msra.mxu0 0
  %874 = vmatprep.subr.bf16.mxu0 0
  %875 = vmatpush2.bf16.msra.mxu0 0
  %876 = vmatprep.subr.bf16.mxu0 0
  %877 = vmatpush2.bf16.msra.mxu0 0
  %878 = vmatprep.mubr.bf16.mxu0 0
  %879 = vmatmul.mubr.bf16.gmra.mxu0 %v832
  %v880 = vpop.f32.mrf.mxu0
  %v881 = vadd.f32 0.0, %v880
  %v882 = vpop.f32.mrf.mxu0
  %v883 = vadd.f32 0.0, %v882
  %v884 = vpop.f32.mrf.mxu0
  %v885 = vpop.f32.mrf.mxu0
  %886 = vdwg.mxu0
  %887 = vmatprep.subr.bf16.mxu0 0
  %888 = vmatpush1.bf16.msra.mxu0 0
  %889 = vmatprep.subr.bf16.mxu0 0
  %890 = vmatpush1.bf16.msra.mxu0 0
  %891 = vmatprep.subr.bf16.mxu0 0
  %892 = vmatpush1.bf16.msra.mxu0 0
  %893 = vmatprep.subr.bf16.mxu0 0
  %894 = vmatpush1.bf16.msra.mxu0 0
  %895 = vmatprep.subr.bf16.mxu0 0
  %896 = vmatpush1.bf16.msra.mxu0 0
  %897 = vmatprep.subr.bf16.mxu0 0
  %898 = vmatpush1.bf16.msra.mxu0 0
  %899 = vmatprep.subr.bf16.mxu0 0
  %900 = vmatpush1.bf16.msra.mxu0 0
  %901 = vmatprep.subr.bf16.mxu0 %v844
  %902 = vmatpush1.bf16.msra.mxu0 %v841
  %903 = vmatprep.subr.bf16.mxu0 0
  %904 = vmatpush2.bf16.msra.mxu0 0
  %905 = vmatprep.subr.bf16.mxu0 0
  %906 = vmatpush2.bf16.msra.mxu0 0
  %907 = vmatprep.subr.bf16.mxu0 0
  %908 = vmatpush2.bf16.msra.mxu0 0
  %909 = vmatprep.subr.bf16.mxu0 0
  %910 = vmatpush2.bf16.msra.mxu0 0
  %911 = vmatprep.subr.bf16.mxu0 0
  %912 = vmatpush2.bf16.msra.mxu0 0
  %913 = vmatprep.subr.bf16.mxu0 0
  %914 = vmatpush2.bf16.msra.mxu0 0
  %915 = vmatprep.subr.bf16.mxu0 0
  %916 = vmatpush2.bf16.msra.mxu0 0
  %917 = vmatprep.subr.bf16.mxu0 0
  %918 = vmatpush2.bf16.msra.mxu0 0
  %919 = vmatprep.mubr.bf16.mxu0 0
  %920 = vmatmul.mubr.bf16.gmra.mxu0 %v832
  %v921 = vpop.f32.mrf.mxu0
  %v922 = vadd.f32 0.0, %v921
  %v923 = vpop.f32.mrf.mxu0
  %v924 = vadd.f32 0.0, %v923
  %v925 = vpop.f32.mrf.mxu0
  %v926 = vpop.f32.mrf.mxu0
  %927 = vdwg.mxu0
  %v928 = vadd.f32 %v697, %v881
  %v929 = vadd.f32 %v698, %v883
  %v930 = vadd.f32 %v699, %v922
  %v931 = vadd.f32 %v700, %v924
  %v932 = vld [vmem:[%s0 + $0x2] sm:$0xff]
  %s933 = scalar_lea.vmem %s2, 16
  %v934 = vld [vmem:[%s933] sm:$0xf]
  %v937 = vunpack.c.l.s4 1966171168
  %v938 = vunpack.c.0.s8 %v937
  %v939 = vlaneseq
  %v940 = vshrl.u32 %v939, 7
  %v941 = vsub.s32 %v938, %v940
  %v942 = vrot.slane %v934, %v941
  %v943 = vcombine.high %v942, %v942
  %v945 = vunpack.c.l.s4 1966171168
  %v946 = vunpack.c.0.s8 %v945
  %v947 = vlaneseq
  %v948 = vshrl.u32 %v947, 7
  %v949 = vsub.s32 %v946, %v948
  %v950 = vrot.slane %v942, %v949
  %v952 = vunpack.c.l.s4 1966171168
  %v953 = vunpack.c.0.s8 %v952
  %v954 = vlaneseq
  %v955 = vshrl.u32 %v954, 7
  %v956 = vsub.s32 %v953, %v955
  %v957 = vrot.slane %v943, %v956
  %v958 = vcombine.high %v950, %v950
  %v959 = vcombine.high %v957, %v957
  %v961 = vpack.i.b16 %v950, %v950
  %v963 = vlaneseq
  %v964 = vshrl.u32 %v963, 7
  %v965 = vsub.s32 0, %v964
  %v966 = vrot.slane %v961, %v965
  %v968 = vpack.i.b16 %v957, %v957
  %v970 = vlaneseq
  %v971 = vshrl.u32 %v970, 7
  %v972 = vsub.s32 0, %v971
  %v973 = vrot.slane %v968, %v972
  %v975 = vpack.i.b16 %v958, %v958
  %v977 = vlaneseq
  %v978 = vshrl.u32 %v977, 7
  %v979 = vsub.s32 0, %v978
  %v980 = vrot.slane %v975, %v979
  %v982 = vpack.i.b16 %v959, %v959
  %v984 = vlaneseq
  %v985 = vshrl.u32 %v984, 7
  %v986 = vsub.s32 0, %v985
  %v987 = vrot.slane %v982, %v986
  %v992 = vcombine.low %v966, %v973
  %v993 = vcombine.low %v980, %v987
  %v995 = vunpack.c.l.s4 1983009808
  %v996 = vunpack.c.0.s8 %v995
  %v997 = vlaneseq
  %v998 = vshrl.u32 %v997, 7
  %v999 = vsub.s32 %v996, %v998
  %v1000 = vrot.slane %v992, %v999
  %v1002 = vunpack.c.l.s4 1983009808
  %v1003 = vunpack.c.0.s8 %v1002
  %v1004 = vlaneseq
  %v1005 = vshrl.u32 %v1004, 7
  %v1006 = vsub.s32 %v1003, %v1005
  %v1007 = vrot.slane %v993, %v1006
  %v1008 = vcombine.low %v1000, %v1007
  %v1010 = vmul.bf16 %v932, %v1008
  %s1011 = scalar_lea.vmem %s1, 16
  %v1012 = vld [vmem:[%s1011] sm:$0xf]
  %v1014 = vcombine.high %v1010, %v1010
  %v1016 = vunpack.c.l.s4 1983009808
  %v1017 = vunpack.c.0.s8 %v1016
  %v1018 = vlaneseq
  %v1019 = vshrl.u32 %v1018, 7
  %v1020 = vsub.s32 %v1017, %v1019
  %v1021 = vrot.slane %v1010, %v1020
  %v1023 = vunpack.c.l.s4 1983009808
  %v1024 = vunpack.c.0.s8 %v1023
  %v1025 = vlaneseq
  %v1026 = vshrl.u32 %v1025, 7
  %v1027 = vsub.s32 %v1024, %v1026
  %v1028 = vrot.slane %v1014, %v1027
  %v1029 = vcombine.high %v1021, %v1021
  %v1030 = vcombine.high %v1028, %v1028
  %v1032 = vsel %vm233, %v1012, 0
  %v1035 = vsel %vm237, %v1021, 0
  %v1038 = vsel %vm237, %v1029, 0
  %v1041 = vsel %vm237, %v1028, 0
  %v1044 = vsel %vm237, %v1030, 0
  %1046 = vmatprep.subr.bf16.mxu0 0
  %1047 = vmatpush1.bf16.msra.mxu0 0
  %1048 = vmatprep.subr.bf16.mxu0 0
  %1049 = vmatpush1.bf16.msra.mxu0 0
  %1050 = vmatprep.subr.bf16.mxu0 0
  %1051 = vmatpush1.bf16.msra.mxu0 0
  %1052 = vmatprep.subr.bf16.mxu0 0
  %1053 = vmatpush1.bf16.msra.mxu0 0
  %1054 = vmatprep.subr.bf16.mxu0 0
  %1055 = vmatpush1.bf16.msra.mxu0 0
  %1056 = vmatprep.subr.bf16.mxu0 0
  %1057 = vmatpush1.bf16.msra.mxu0 0
  %1058 = vmatprep.subr.bf16.mxu0 0
  %1059 = vmatpush1.bf16.msra.mxu0 0
  %1060 = vmatprep.subr.bf16.mxu0 %v1038
  %1061 = vmatpush1.bf16.msra.mxu0 %v1035
  %1062 = vmatprep.subr.bf16.mxu0 0
  %1063 = vmatpush2.bf16.msra.mxu0 0
  %1064 = vmatprep.subr.bf16.mxu0 0
  %1065 = vmatpush2.bf16.msra.mxu0 0
  %1066 = vmatprep.subr.bf16.mxu0 0
  %1067 = vmatpush2.bf16.msra.mxu0 0
  %1068 = vmatprep.subr.bf16.mxu0 0
  %1069 = vmatpush2.bf16.msra.mxu0 0
  %1070 = vmatprep.subr.bf16.mxu0 0
  %1071 = vmatpush2.bf16.msra.mxu0 0
  %1072 = vmatprep.subr.bf16.mxu0 0
  %1073 = vmatpush2.bf16.msra.mxu0 0
  %1074 = vmatprep.subr.bf16.mxu0 0
  %1075 = vmatpush2.bf16.msra.mxu0 0
  %1076 = vmatprep.subr.bf16.mxu0 0
  %1077 = vmatpush2.bf16.msra.mxu0 0
  %1078 = vmatprep.mubr.bf16.mxu0 0
  %1079 = vmatmul.mubr.bf16.gmra.mxu0 %v1032
  %v1080 = vpop.f32.mrf.mxu0
  %v1081 = vadd.f32 0.0, %v1080
  %v1082 = vpop.f32.mrf.mxu0
  %v1083 = vadd.f32 0.0, %v1082
  %v1084 = vpop.f32.mrf.mxu0
  %v1085 = vpop.f32.mrf.mxu0
  %1086 = vdwg.mxu0
  %1087 = vmatprep.subr.bf16.mxu0 0
  %1088 = vmatpush1.bf16.msra.mxu0 0
  %1089 = vmatprep.subr.bf16.mxu0 0
  %1090 = vmatpush1.bf16.msra.mxu0 0
  %1091 = vmatprep.subr.bf16.mxu0 0
  %1092 = vmatpush1.bf16.msra.mxu0 0
  %1093 = vmatprep.subr.bf16.mxu0 0
  %1094 = vmatpush1.bf16.msra.mxu0 0
  %1095 = vmatprep.subr.bf16.mxu0 0
  %1096 = vmatpush1.bf16.msra.mxu0 0
  %1097 = vmatprep.subr.bf16.mxu0 0
  %1098 = vmatpush1.bf16.msra.mxu0 0
  %1099 = vmatprep.subr.bf16.mxu0 0
  %1100 = vmatpush1.bf16.msra.mxu0 0
  %1101 = vmatprep.subr.bf16.mxu0 %v1044
  %1102 = vmatpush1.bf16.msra.mxu0 %v1041
  %1103 = vmatprep.subr.bf16.mxu0 0
  %1104 = vmatpush2.bf16.msra.mxu0 0
  %1105 = vmatprep.subr.bf16.mxu0 0
  %1106 = vmatpush2.bf16.msra.mxu0 0
  %1107 = vmatprep.subr.bf16.mxu0 0
  %1108 = vmatpush2.bf16.msra.mxu0 0
  %1109 = vmatprep.subr.bf16.mxu0 0
  %1110 = vmatpush2.bf16.msra.mxu0 0
  %1111 = vmatprep.subr.bf16.mxu0 0
  %1112 = vmatpush2.bf16.msra.mxu0 0
  %1113 = vmatprep.subr.bf16.mxu0 0
  %1114 = vmatpush2.bf16.msra.mxu0 0
  %1115 = vmatprep.subr.bf16.mxu0 0
  %1116 = vmatpush2.bf16.msra.mxu0 0
  %1117 = vmatprep.subr.bf16.mxu0 0
  %1118 = vmatpush2.bf16.msra.mxu0 0
  %1119 = vmatprep.mubr.bf16.mxu0 0
  %1120 = vmatmul.mubr.bf16.gmra.mxu0 %v1032
  %v1121 = vpop.f32.mrf.mxu0
  %v1122 = vadd.f32 0.0, %v1121
  %v1123 = vpop.f32.mrf.mxu0
  %v1124 = vadd.f32 0.0, %v1123
  %v1125 = vpop.f32.mrf.mxu0
  %v1126 = vpop.f32.mrf.mxu0
  %1127 = vdwg.mxu0
  %v1128 = vadd.f32 %v928, %v1081
  %v1129 = vadd.f32 %v929, %v1083
  %v1130 = vadd.f32 %v930, %v1122
  %v1131 = vadd.f32 %v931, %v1124
  %v1132 = vld [vmem:[%s0 + $0x2] sm:$0xff]
  %v1133 = vld [vmem:[%s0 + $0xa] sm:$0x3]
  %s1134 = scalar_lea.vmem %s2, 20
  %v1135 = vld [vmem:[%s1134] sm:$0xf]
  %v1138 = vunpack.c.l.s4 1966171168
  %v1139 = vunpack.c.0.s8 %v1138
  %v1140 = vlaneseq
  %v1141 = vshrl.u32 %v1140, 7
  %v1142 = vsub.s32 %v1139, %v1141
  %v1143 = vrot.slane %v1135, %v1142
  %v1144 = vcombine.high %v1143, %v1143
  %v1146 = vunpack.c.l.s4 1966171168
  %v1147 = vunpack.c.0.s8 %v1146
  %v1148 = vlaneseq
  %v1149 = vshrl.u32 %v1148, 7
  %v1150 = vsub.s32 %v1147, %v1149
  %v1151 = vrot.slane %v1143, %v1150
  %v1153 = vunpack.c.l.s4 1966171168
  %v1154 = vunpack.c.0.s8 %v1153
  %v1155 = vlaneseq
  %v1156 = vshrl.u32 %v1155, 7
  %v1157 = vsub.s32 %v1154, %v1156
  %v1158 = vrot.slane %v1144, %v1157
  %v1159 = vcombine.high %v1151, %v1151
  %v1160 = vcombine.high %v1158, %v1158
  %v1162 = vpack.i.b16 %v1151, %v1151
  %v1164 = vlaneseq
  %v1165 = vshrl.u32 %v1164, 7
  %v1166 = vsub.s32 0, %v1165
  %v1167 = vrot.slane %v1162, %v1166
  %v1169 = vpack.i.b16 %v1158, %v1158
  %v1171 = vlaneseq
  %v1172 = vshrl.u32 %v1171, 7
  %v1173 = vsub.s32 0, %v1172
  %v1174 = vrot.slane %v1169, %v1173
  %v1176 = vpack.i.b16 %v1159, %v1159
  %v1178 = vlaneseq
  %v1179 = vshrl.u32 %v1178, 7
  %v1180 = vsub.s32 0, %v1179
  %v1181 = vrot.slane %v1176, %v1180
  %v1183 = vpack.i.b16 %v1160, %v1160
  %v1185 = vlaneseq
  %v1186 = vshrl.u32 %v1185, 7
  %v1187 = vsub.s32 0, %v1186
  %v1188 = vrot.slane %v1183, %v1187
  %v1193 = vcombine.low %v1167, %v1174
  %v1194 = vcombine.low %v1181, %v1188
  %v1196 = vunpack.c.l.s4 1983009808
  %v1197 = vunpack.c.0.s8 %v1196
  %v1198 = vlaneseq
  %v1199 = vshrl.u32 %v1198, 7
  %v1200 = vsub.s32 %v1197, %v1199
  %v1201 = vrot.slane %v1193, %v1200
  %v1203 = vunpack.c.l.s4 1983009808
  %v1204 = vunpack.c.0.s8 %v1203
  %v1205 = vlaneseq
  %v1206 = vshrl.u32 %v1205, 7
  %v1207 = vsub.s32 %v1204, %v1206
  %v1208 = vrot.slane %v1194, %v1207
  %v1209 = vcombine.low %v1201, %v1208
  %1210 = vrot.lane.b32.xlu0 %v1209, 1
  %v1211 = vpop.permute.xlu0 %1210
  %v1212 = vrot.slane %v1211, 6
  %v1213 = vsel %vm826, %v1212, %v1211
  %v1216 = vmul.bf16 %v1132, %v1213
  %v1217 = vmul.bf16 %v1133, %v1212
  %s1218 = scalar_lea.vmem %s1, 20
  %v1219 = vld [vmem:[%s1218] sm:$0xf]
  %v1222 = vcombine.high %v1216, %v1216
  %v1224 = vunpack.c.l.s4 1983009808
  %v1225 = vunpack.c.0.s8 %v1224
  %v1226 = vlaneseq
  %v1227 = vshrl.u32 %v1226, 7
  %v1228 = vsub.s32 %v1225, %v1227
  %v1229 = vrot.slane %v1216, %v1228
  %v1231 = vunpack.c.l.s4 1983009808
  %v1232 = vunpack.c.0.s8 %v1231
  %v1233 = vlaneseq
  %v1234 = vshrl.u32 %v1233, 7
  %v1235 = vsub.s32 %v1232, %v1234
  %v1236 = vrot.slane %v1222, %v1235
  %v1237 = vcombine.high %v1229, %v1229
  %v1238 = vcombine.high %v1236, %v1236
  %v1240 = vunpack.c.l.s4 1983009808
  %v1241 = vunpack.c.0.s8 %v1240
  %v1242 = vlaneseq
  %v1243 = vshrl.u32 %v1242, 7
  %v1244 = vsub.s32 %v1241, %v1243
  %v1245 = vrot.slane %v1217, %v1244
  %1246 = vrot.lane.b32.xlu0 %v1229, 127
  %v1247 = vpop.permute.xlu0 %1246
  %1248 = vrot.lane.b32.xlu0 %v1237, 127
  %v1249 = vpop.permute.xlu0 %1248
  %1250 = vrot.lane.b32.xlu0 %v1236, 127
  %v1251 = vpop.permute.xlu0 %1250
  %1252 = vrot.lane.b32.xlu0 %v1238, 127
  %v1253 = vpop.permute.xlu0 %1252
  %1254 = vrot.lane.b32.xlu0 %v1245, 127
  %v1255 = vpop.permute.xlu0 %1254
  %v1256 = vsel %vm782, %v1247, %v1249
  %v1257 = vsel %vm782, %v1249, %v1251
  %v1258 = vsel %vm782, %v1251, %v1253
  %v1259 = vsel %vm782, %v1253, %v1255
  %v1261 = vsel %vm233, %v1219, 0
  %v1264 = vsel %vm237, %v1256, 0
  %v1267 = vsel %vm237, %v1257, 0
  %v1270 = vsel %vm237, %v1258, 0
  %v1273 = vsel %vm237, %v1259, 0
  %1275 = vmatprep.subr.bf16.mxu0 0
  %1276 = vmatpush1.bf16.msra.mxu0 0
  %1277 = vmatprep.subr.bf16.mxu0 0
  %1278 = vmatpush1.bf16.msra.mxu0 0
  %1279 = vmatprep.subr.bf16.mxu0 0
  %1280 = vmatpush1.bf16.msra.mxu0 0
  %1281 = vmatprep.subr.bf16.mxu0 0
  %1282 = vmatpush1.bf16.msra.mxu0 0
  %1283 = vmatprep.subr.bf16.mxu0 0
  %1284 = vmatpush1.bf16.msra.mxu0 0
  %1285 = vmatprep.subr.bf16.mxu0 0
  %1286 = vmatpush1.bf16.msra.mxu0 0
  %1287 = vmatprep.subr.bf16.mxu0 0
  %1288 = vmatpush1.bf16.msra.mxu0 0
  %1289 = vmatprep.subr.bf16.mxu0 %v1267
  %1290 = vmatpush1.bf16.msra.mxu0 %v1264
  %1291 = vmatprep.subr.bf16.mxu0 0
  %1292 = vmatpush2.bf16.msra.mxu0 0
  %1293 = vmatprep.subr.bf16.mxu0 0
  %1294 = vmatpush2.bf16.msra.mxu0 0
  %1295 = vmatprep.subr.bf16.mxu0 0
  %1296 = vmatpush2.bf16.msra.mxu0 0
  %1297 = vmatprep.subr.bf16.mxu0 0
  %1298 = vmatpush2.bf16.msra.mxu0 0
  %1299 = vmatprep.subr.bf16.mxu0 0
  %1300 = vmatpush2.bf16.msra.mxu0 0
  %1301 = vmatprep.subr.bf16.mxu0 0
  %1302 = vmatpush2.bf16.msra.mxu0 0
  %1303 = vmatprep.subr.bf16.mxu0 0
  %1304 = vmatpush2.bf16.msra.mxu0 0
  %1305 = vmatprep.subr.bf16.mxu0 0
  %1306 = vmatpush2.bf16.msra.mxu0 0
  %1307 = vmatprep.mubr.bf16.mxu0 0
  %1308 = vmatmul.mubr.bf16.gmra.mxu0 %v1261
  %v1309 = vpop.f32.mrf.mxu0
  %v1310 = vadd.f32 0.0, %v1309
  %v1311 = vpop.f32.mrf.mxu0
  %v1312 = vadd.f32 0.0, %v1311
  %v1313 = vpop.f32.mrf.mxu0
  %v1314 = vpop.f32.mrf.mxu0
  %1315 = vdwg.mxu0
  %1316 = vmatprep.subr.bf16.mxu0 0
  %1317 = vmatpush1.bf16.msra.mxu0 0
  %1318 = vmatprep.subr.bf16.mxu0 0
  %1319 = vmatpush1.bf16.msra.mxu0 0
  %1320 = vmatprep.subr.bf16.mxu0 0
  %1321 = vmatpush1.bf16.msra.mxu0 0
  %1322 = vmatprep.subr.bf16.mxu0 0
  %1323 = vmatpush1.bf16.msra.mxu0 0
  %1324 = vmatprep.subr.bf16.mxu0 0
  %1325 = vmatpush1.bf16.msra.mxu0 0
  %1326 = vmatprep.subr.bf16.mxu0 0
  %1327 = vmatpush1.bf16.msra.mxu0 0
  %1328 = vmatprep.subr.bf16.mxu0 0
  %1329 = vmatpush1.bf16.msra.mxu0 0
  %1330 = vmatprep.subr.bf16.mxu0 %v1273
  %1331 = vmatpush1.bf16.msra.mxu0 %v1270
  %1332 = vmatprep.subr.bf16.mxu0 0
  %1333 = vmatpush2.bf16.msra.mxu0 0
  %1334 = vmatprep.subr.bf16.mxu0 0
  %1335 = vmatpush2.bf16.msra.mxu0 0
  %1336 = vmatprep.subr.bf16.mxu0 0
  %1337 = vmatpush2.bf16.msra.mxu0 0
  %1338 = vmatprep.subr.bf16.mxu0 0
  %1339 = vmatpush2.bf16.msra.mxu0 0
  %1340 = vmatprep.subr.bf16.mxu0 0
  %1341 = vmatpush2.bf16.msra.mxu0 0
  %1342 = vmatprep.subr.bf16.mxu0 0
  %1343 = vmatpush2.bf16.msra.mxu0 0
  %1344 = vmatprep.subr.bf16.mxu0 0
  %1345 = vmatpush2.bf16.msra.mxu0 0
  %1346 = vmatprep.subr.bf16.mxu0 0
  %1347 = vmatpush2.bf16.msra.mxu0 0
  %1348 = vmatprep.mubr.bf16.mxu0 0
  %1349 = vmatmul.mubr.bf16.gmra.mxu0 %v1261
  %v1350 = vpop.f32.mrf.mxu0
  %v1351 = vadd.f32 0.0, %v1350
  %v1352 = vpop.f32.mrf.mxu0
  %v1353 = vadd.f32 0.0, %v1352
  %v1354 = vpop.f32.mrf.mxu0
  %v1355 = vpop.f32.mrf.mxu0
  %1356 = vdwg.mxu0
  %v1357 = vadd.f32 %v1128, %v1310
  %v1358 = vadd.f32 %v1129, %v1312
  %v1359 = vadd.f32 %v1130, %v1351
  %v1360 = vadd.f32 %v1131, %v1353
  %v1361 = vld [vmem:[%s0 + $0x2] sm:$0xff]
  %v1362 = vld [vmem:[%s0 + $0xa] sm:$0x3]
  %s1363 = scalar_lea.vmem %s2, 24
  %v1364 = vld [vmem:[%s1363] sm:$0xf]
  %v1367 = vunpack.c.l.s4 1966171168
  %v1368 = vunpack.c.0.s8 %v1367
  %v1369 = vlaneseq
  %v1370 = vshrl.u32 %v1369, 7
  %v1371 = vsub.s32 %v1368, %v1370
  %v1372 = vrot.slane %v1364, %v1371
  %v1373 = vcombine.high %v1372, %v1372
  %v1375 = vunpack.c.l.s4 1966171168
  %v1376 = vunpack.c.0.s8 %v1375
  %v1377 = vlaneseq
  %v1378 = vshrl.u32 %v1377, 7
  %v1379 = vsub.s32 %v1376, %v1378
  %v1380 = vrot.slane %v1372, %v1379
  %v1382 = vunpack.c.l.s4 1966171168
  %v1383 = vunpack.c.0.s8 %v1382
  %v1384 = vlaneseq
  %v1385 = vshrl.u32 %v1384, 7
  %v1386 = vsub.s32 %v1383, %v1385
  %v1387 = vrot.slane %v1373, %v1386
  %v1388 = vcombine.high %v1380, %v1380
  %v1389 = vcombine.high %v1387, %v1387
  %v1391 = vpack.i.b16 %v1380, %v1380
  %v1393 = vlaneseq
  %v1394 = vshrl.u32 %v1393, 7
  %v1395 = vsub.s32 0, %v1394
  %v1396 = vrot.slane %v1391, %v1395
  %v1398 = vpack.i.b16 %v1387, %v1387
  %v1400 = vlaneseq
  %v1401 = vshrl.u32 %v1400, 7
  %v1402 = vsub.s32 0, %v1401
  %v1403 = vrot.slane %v1398, %v1402
  %v1405 = vpack.i.b16 %v1388, %v1388
  %v1407 = vlaneseq
  %v1408 = vshrl.u32 %v1407, 7
  %v1409 = vsub.s32 0, %v1408
  %v1410 = vrot.slane %v1405, %v1409
  %v1412 = vpack.i.b16 %v1389, %v1389
  %v1414 = vlaneseq
  %v1415 = vshrl.u32 %v1414, 7
  %v1416 = vsub.s32 0, %v1415
  %v1417 = vrot.slane %v1412, %v1416
  %v1422 = vcombine.low %v1396, %v1403
  %v1423 = vcombine.low %v1410, %v1417
  %v1425 = vunpack.c.l.s4 1983009808
  %v1426 = vunpack.c.0.s8 %v1425
  %v1427 = vlaneseq
  %v1428 = vshrl.u32 %v1427, 7
  %v1429 = vsub.s32 %v1426, %v1428
  %v1430 = vrot.slane %v1422, %v1429
  %v1432 = vunpack.c.l.s4 1983009808
  %v1433 = vunpack.c.0.s8 %v1432
  %v1434 = vlaneseq
  %v1435 = vshrl.u32 %v1434, 7
  %v1436 = vsub.s32 %v1433, %v1435
  %v1437 = vrot.slane %v1423, %v1436
  %v1438 = vcombine.low %v1430, %v1437
  %1439 = vrot.lane.b32.xlu0 %v1438, 15
  %v1440 = vpop.permute.xlu0 %1439
  %v1441 = vrot.slane %v1440, 6
  %v1442 = vsel %vm595, %v1441, %v1440
  %v1445 = vmul.bf16 %v1361, %v1442
  %v1446 = vmul.bf16 %v1362, %v1441
  %s1447 = scalar_lea.vmem %s1, 24
  %v1448 = vld [vmem:[%s1447] sm:$0xf]
  %v1451 = vcombine.high %v1445, %v1445
  %v1453 = vunpack.c.l.s4 1983009808
  %v1454 = vunpack.c.0.s8 %v1453
  %v1455 = vlaneseq
  %v1456 = vshrl.u32 %v1455, 7
  %v1457 = vsub.s32 %v1454, %v1456
  %v1458 = vrot.slane %v1445, %v1457
  %v1460 = vunpack.c.l.s4 1983009808
  %v1461 = vunpack.c.0.s8 %v1460
  %v1462 = vlaneseq
  %v1463 = vshrl.u32 %v1462, 7
  %v1464 = vsub.s32 %v1461, %v1463
  %v1465 = vrot.slane %v1451, %v1464
  %v1466 = vcombine.high %v1458, %v1458
  %v1467 = vcombine.high %v1465, %v1465
  %v1469 = vunpack.c.l.s4 1983009808
  %v1470 = vunpack.c.0.s8 %v1469
  %v1471 = vlaneseq
  %v1472 = vshrl.u32 %v1471, 7
  %v1473 = vsub.s32 %v1470, %v1472
  %v1474 = vrot.slane %v1446, %v1473
  %1475 = vrot.lane.b32.xlu0 %v1458, 113
  %v1476 = vpop.permute.xlu0 %1475
  %1477 = vrot.lane.b32.xlu0 %v1466, 113
  %v1478 = vpop.permute.xlu0 %1477
  %1479 = vrot.lane.b32.xlu0 %v1465, 113
  %v1480 = vpop.permute.xlu0 %1479
  %1481 = vrot.lane.b32.xlu0 %v1467, 113
  %v1482 = vpop.permute.xlu0 %1481
  %1483 = vrot.lane.b32.xlu0 %v1474, 113
  %v1484 = vpop.permute.xlu0 %1483
  %v1485 = vsel %vm551, %v1476, %v1478
  %v1486 = vsel %vm551, %v1478, %v1480
  %v1487 = vsel %vm551, %v1480, %v1482
  %v1488 = vsel %vm551, %v1482, %v1484
  %v1490 = vsel %vm233, %v1448, 0
  %v1493 = vsel %vm237, %v1485, 0
  %v1496 = vsel %vm237, %v1486, 0
  %v1499 = vsel %vm237, %v1487, 0
  %v1502 = vsel %vm237, %v1488, 0
  %1504 = vmatprep.subr.bf16.mxu0 0
  %1505 = vmatpush1.bf16.msra.mxu0 0
  %1506 = vmatprep.subr.bf16.mxu0 0
  %1507 = vmatpush1.bf16.msra.mxu0 0
  %1508 = vmatprep.subr.bf16.mxu0 0
  %1509 = vmatpush1.bf16.msra.mxu0 0
  %1510 = vmatprep.subr.bf16.mxu0 0
  %1511 = vmatpush1.bf16.msra.mxu0 0
  %1512 = vmatprep.subr.bf16.mxu0 0
  %1513 = vmatpush1.bf16.msra.mxu0 0
  %1514 = vmatprep.subr.bf16.mxu0 0
  %1515 = vmatpush1.bf16.msra.mxu0 0
  %1516 = vmatprep.subr.bf16.mxu0 0
  %1517 = vmatpush1.bf16.msra.mxu0 0
  %1518 = vmatprep.subr.bf16.mxu0 %v1496
  %1519 = vmatpush1.bf16.msra.mxu0 %v1493
  %1520 = vmatprep.subr.bf16.mxu0 0
  %1521 = vmatpush2.bf16.msra.mxu0 0
  %1522 = vmatprep.subr.bf16.mxu0 0
  %1523 = vmatpush2.bf16.msra.mxu0 0
  %1524 = vmatprep.subr.bf16.mxu0 0
  %1525 = vmatpush2.bf16.msra.mxu0 0
  %1526 = vmatprep.subr.bf16.mxu0 0
  %1527 = vmatpush2.bf16.msra.mxu0 0
  %1528 = vmatprep.subr.bf16.mxu0 0
  %1529 = vmatpush2.bf16.msra.mxu0 0
  %1530 = vmatprep.subr.bf16.mxu0 0
  %1531 = vmatpush2.bf16.msra.mxu0 0
  %1532 = vmatprep.subr.bf16.mxu0 0
  %1533 = vmatpush2.bf16.msra.mxu0 0
  %1534 = vmatprep.subr.bf16.mxu0 0
  %1535 = vmatpush2.bf16.msra.mxu0 0
  %1536 = vmatprep.mubr.bf16.mxu0 0
  %1537 = vmatmul.mubr.bf16.gmra.mxu0 %v1490
  %v1538 = vpop.f32.mrf.mxu0
  %v1539 = vadd.f32 0.0, %v1538
  %v1540 = vpop.f32.mrf.mxu0
  %v1541 = vadd.f32 0.0, %v1540
  %v1542 = vpop.f32.mrf.mxu0
  %v1543 = vpop.f32.mrf.mxu0
  %1544 = vdwg.mxu0
  %1545 = vmatprep.subr.bf16.mxu0 0
  %1546 = vmatpush1.bf16.msra.mxu0 0
  %1547 = vmatprep.subr.bf16.mxu0 0
  %1548 = vmatpush1.bf16.msra.mxu0 0
  %1549 = vmatprep.subr.bf16.mxu0 0
  %1550 = vmatpush1.bf16.msra.mxu0 0
  %1551 = vmatprep.subr.bf16.mxu0 0
  %1552 = vmatpush1.bf16.msra.mxu0 0
  %1553 = vmatprep.subr.bf16.mxu0 0
  %1554 = vmatpush1.bf16.msra.mxu0 0
  %1555 = vmatprep.subr.bf16.mxu0 0
  %1556 = vmatpush1.bf16.msra.mxu0 0
  %1557 = vmatprep.subr.bf16.mxu0 0
  %1558 = vmatpush1.bf16.msra.mxu0 0
  %1559 = vmatprep.subr.bf16.mxu0 %v1502
  %1560 = vmatpush1.bf16.msra.mxu0 %v1499
  %1561 = vmatprep.subr.bf16.mxu0 0
  %1562 = vmatpush2.bf16.msra.mxu0 0
  %1563 = vmatprep.subr.bf16.mxu0 0
  %1564 = vmatpush2.bf16.msra.mxu0 0
  %1565 = vmatprep.subr.bf16.mxu0 0
  %1566 = vmatpush2.bf16.msra.mxu0 0
  %1567 = vmatprep.subr.bf16.mxu0 0
  %1568 = vmatpush2.bf16.msra.mxu0 0
  %1569 = vmatprep.subr.bf16.mxu0 0
  %1570 = vmatpush2.bf16.msra.mxu0 0
  %1571 = vmatprep.subr.bf16.mxu0 0
  %1572 = vmatpush2.bf16.msra.mxu0 0
  %1573 = vmatprep.subr.bf16.mxu0 0
  %1574 = vmatpush2.bf16.msra.mxu0 0
  %1575 = vmatprep.subr.bf16.mxu0 0
  %1576 = vmatpush2.bf16.msra.mxu0 0
  %1577 = vmatprep.mubr.bf16.mxu0 0
  %1578 = vmatmul.mubr.bf16.gmra.mxu0 %v1490
  %v1579 = vpop.f32.mrf.mxu0
  %v1580 = vadd.f32 0.0, %v1579
  %v1581 = vpop.f32.mrf.mxu0
  %v1582 = vadd.f32 0.0, %v1581
  %v1583 = vpop.f32.mrf.mxu0
  %v1584 = vpop.f32.mrf.mxu0
  %1585 = vdwg.mxu0
  %v1586 = vadd.f32 %v1357, %v1539
  %v1587 = vadd.f32 %v1358, %v1541
  %v1588 = vadd.f32 %v1359, %v1580
  %v1589 = vadd.f32 %v1360, %v1582
  %v1590 = vld [vmem:[%s0 + $0x2] sm:$0xff]
  %v1591 = vld [vmem:[%s0 + $0xa] sm:$0x3]
  %s1592 = scalar_lea.vmem %s2, 28
  %v1593 = vld [vmem:[%s1592] sm:$0xf]
  %v1596 = vunpack.c.l.s4 1966171168
  %v1597 = vunpack.c.0.s8 %v1596
  %v1598 = vlaneseq
  %v1599 = vshrl.u32 %v1598, 7
  %v1600 = vsub.s32 %v1597, %v1599
  %v1601 = vrot.slane %v1593, %v1600
  %v1602 = vcombine.high %v1601, %v1601
  %v1604 = vunpack.c.l.s4 1966171168
  %v1605 = vunpack.c.0.s8 %v1604
  %v1606 = vlaneseq
  %v1607 = vshrl.u32 %v1606, 7
  %v1608 = vsub.s32 %v1605, %v1607
  %v1609 = vrot.slane %v1601, %v1608
  %v1611 = vunpack.c.l.s4 1966171168
  %v1612 = vunpack.c.0.s8 %v1611
  %v1613 = vlaneseq
  %v1614 = vshrl.u32 %v1613, 7
  %v1615 = vsub.s32 %v1612, %v1614
  %v1616 = vrot.slane %v1602, %v1615
  %v1617 = vcombine.high %v1609, %v1609
  %v1618 = vcombine.high %v1616, %v1616
  %v1620 = vpack.i.b16 %v1609, %v1609
  %v1622 = vlaneseq
  %v1623 = vshrl.u32 %v1622, 7
  %v1624 = vsub.s32 0, %v1623
  %v1625 = vrot.slane %v1620, %v1624
  %v1627 = vpack.i.b16 %v1616, %v1616
  %v1629 = vlaneseq
  %v1630 = vshrl.u32 %v1629, 7
  %v1631 = vsub.s32 0, %v1630
  %v1632 = vrot.slane %v1627, %v1631
  %v1634 = vpack.i.b16 %v1617, %v1617
  %v1636 = vlaneseq
  %v1637 = vshrl.u32 %v1636, 7
  %v1638 = vsub.s32 0, %v1637
  %v1639 = vrot.slane %v1634, %v1638
  %v1641 = vpack.i.b16 %v1618, %v1618
  %v1643 = vlaneseq
  %v1644 = vshrl.u32 %v1643, 7
  %v1645 = vsub.s32 0, %v1644
  %v1646 = vrot.slane %v1641, %v1645
  %v1651 = vcombine.low %v1625, %v1632
  %v1652 = vcombine.low %v1639, %v1646
  %v1654 = vunpack.c.l.s4 1983009808
  %v1655 = vunpack.c.0.s8 %v1654
  %v1656 = vlaneseq
  %v1657 = vshrl.u32 %v1656, 7
  %v1658 = vsub.s32 %v1655, %v1657
  %v1659 = vrot.slane %v1651, %v1658
  %v1661 = vunpack.c.l.s4 1983009808
  %v1662 = vunpack.c.0.s8 %v1661
  %v1663 = vlaneseq
  %v1664 = vshrl.u32 %v1663, 7
  %v1665 = vsub.s32 %v1662, %v1664
  %v1666 = vrot.slane %v1652, %v1665
  %v1667 = vcombine.low %v1659, %v1666
  %1668 = vrot.lane.b32.xlu0 %v1667, 16
  %v1669 = vpop.permute.xlu0 %1668
  %v1670 = vrot.slane %v1669, 6
  %v1671 = vsel %vm228, %v1670, %v1669
  %v1674 = vmul.bf16 %v1590, %v1671
  %v1675 = vmul.bf16 %v1591, %v1670
  %s1676 = scalar_lea.vmem %s1, 28
  %v1677 = vld [vmem:[%s1676] sm:$0xf]
  %v1680 = vcombine.high %v1674, %v1674
  %v1682 = vunpack.c.l.s4 1983009808
  %v1683 = vunpack.c.0.s8 %v1682
  %v1684 = vlaneseq
  %v1685 = vshrl.u32 %v1684, 7
  %v1686 = vsub.s32 %v1683, %v1685
  %v1687 = vrot.slane %v1674, %v1686
  %v1689 = vunpack.c.l.s4 1983009808
  %v1690 = vunpack.c.0.s8 %v1689
  %v1691 = vlaneseq
  %v1692 = vshrl.u32 %v1691, 7
  %v1693 = vsub.s32 %v1690, %v1692
  %v1694 = vrot.slane %v1680, %v1693
  %v1695 = vcombine.high %v1687, %v1687
  %v1696 = vcombine.high %v1694, %v1694
  %v1698 = vunpack.c.l.s4 1983009808
  %v1699 = vunpack.c.0.s8 %v1698
  %v1700 = vlaneseq
  %v1701 = vshrl.u32 %v1700, 7
  %v1702 = vsub.s32 %v1699, %v1701
  %v1703 = vrot.slane %v1675, %v1702
  %1704 = vrot.lane.b32.xlu0 %v1687, 112
  %v1705 = vpop.permute.xlu0 %1704
  %1706 = vrot.lane.b32.xlu0 %v1695, 112
  %v1707 = vpop.permute.xlu0 %1706
  %1708 = vrot.lane.b32.xlu0 %v1694, 112
  %v1709 = vpop.permute.xlu0 %1708
  %1710 = vrot.lane.b32.xlu0 %v1696, 112
  %v1711 = vpop.permute.xlu0 %1710
  %1712 = vrot.lane.b32.xlu0 %v1703, 112
  %v1713 = vpop.permute.xlu0 %1712
  %v1714 = vsel %vm184, %v1705, %v1707
  %v1715 = vsel %vm184, %v1707, %v1709
  %v1716 = vsel %vm184, %v1709, %v1711
  %v1717 = vsel %vm184, %v1711, %v1713
  %v1719 = vsel %vm233, %v1677, 0
  %v1722 = vsel %vm237, %v1714, 0
  %v1725 = vsel %vm237, %v1715, 0
  %v1728 = vsel %vm237, %v1716, 0
  %v1731 = vsel %vm237, %v1717, 0
  %1733 = vmatprep.subr.bf16.mxu0 0
  %1734 = vmatpush1.bf16.msra.mxu0 0
  %1735 = vmatprep.subr.bf16.mxu0 0
  %1736 = vmatpush1.bf16.msra.mxu0 0
  %1737 = vmatprep.subr.bf16.mxu0 0
  %1738 = vmatpush1.bf16.msra.mxu0 0
  %1739 = vmatprep.subr.bf16.mxu0 0
  %1740 = vmatpush1.bf16.msra.mxu0 0
  %1741 = vmatprep.subr.bf16.mxu0 0
  %1742 = vmatpush1.bf16.msra.mxu0 0
  %1743 = vmatprep.subr.bf16.mxu0 0
  %1744 = vmatpush1.bf16.msra.mxu0 0
  %1745 = vmatprep.subr.bf16.mxu0 0
  %1746 = vmatpush1.bf16.msra.mxu0 0
  %1747 = vmatprep.subr.bf16.mxu0 %v1725
  %1748 = vmatpush1.bf16.msra.mxu0 %v1722
  %1749 = vmatprep.subr.bf16.mxu0 0
  %1750 = vmatpush2.bf16.msra.mxu0 0
  %1751 = vmatprep.subr.bf16.mxu0 0
  %1752 = vmatpush2.bf16.msra.mxu0 0
  %1753 = vmatprep.subr.bf16.mxu0 0
  %1754 = vmatpush2.bf16.msra.mxu0 0
  %1755 = vmatprep.subr.bf16.mxu0 0
  %1756 = vmatpush2.bf16.msra.mxu0 0
  %1757 = vmatprep.subr.bf16.mxu0 0
  %1758 = vmatpush2.bf16.msra.mxu0 0
  %1759 = vmatprep.subr.bf16.mxu0 0
  %1760 = vmatpush2.bf16.msra.mxu0 0
  %1761 = vmatprep.subr.bf16.mxu0 0
  %1762 = vmatpush2.bf16.msra.mxu0 0
  %1763 = vmatprep.subr.bf16.mxu0 0
  %1764 = vmatpush2.bf16.msra.mxu0 0
  %1765 = vmatprep.mubr.bf16.mxu0 0
  %1766 = vmatmul.mubr.bf16.gmra.mxu0 %v1719
  %v1767 = vpop.f32.mrf.mxu0
  %v1768 = vadd.f32 0.0, %v1767
  %v1769 = vpop.f32.mrf.mxu0
  %v1770 = vadd.f32 0.0, %v1769
  %v1771 = vpop.f32.mrf.mxu0
  %v1772 = vpop.f32.mrf.mxu0
  %1773 = vdwg.mxu0
  %1774 = vmatprep.subr.bf16.mxu0 0
  %1775 = vmatpush1.bf16.msra.mxu0 0
  %1776 = vmatprep.subr.bf16.mxu0 0
  %1777 = vmatpush1.bf16.msra.mxu0 0
  %1778 = vmatprep.subr.bf16.mxu0 0
  %1779 = vmatpush1.bf16.msra.mxu0 0
  %1780 = vmatprep.subr.bf16.mxu0 0
  %1781 = vmatpush1.bf16.msra.mxu0 0
  %1782 = vmatprep.subr.bf16.mxu0 0
  %1783 = vmatpush1.bf16.msra.mxu0 0
  %1784 = vmatprep.subr.bf16.mxu0 0
  %1785 = vmatpush1.bf16.msra.mxu0 0
  %1786 = vmatprep.subr.bf16.mxu0 0
  %1787 = vmatpush1.bf16.msra.mxu0 0
  %1788 = vmatprep.subr.bf16.mxu0 %v1731
  %1789 = vmatpush1.bf16.msra.mxu0 %v1728
  %1790 = vmatprep.subr.bf16.mxu0 0
  %1791 = vmatpush2.bf16.msra.mxu0 0
  %1792 = vmatprep.subr.bf16.mxu0 0
  %1793 = vmatpush2.bf16.msra.mxu0 0
  %1794 = vmatprep.subr.bf16.mxu0 0
  %1795 = vmatpush2.bf16.msra.mxu0 0
  %1796 = vmatprep.subr.bf16.mxu0 0
  %1797 = vmatpush2.bf16.msra.mxu0 0
  %1798 = vmatprep.subr.bf16.mxu0 0
  %1799 = vmatpush2.bf16.msra.mxu0 0
  %1800 = vmatprep.subr.bf16.mxu0 0
  %1801 = vmatpush2.bf16.msra.mxu0 0
  %1802 = vmatprep.subr.bf16.mxu0 0
  %1803 = vmatpush2.bf16.msra.mxu0 0
  %1804 = vmatprep.subr.bf16.mxu0 0
  %1805 = vmatpush2.bf16.msra.mxu0 0
  %1806 = vmatprep.mubr.bf16.mxu0 0
  %1807 = vmatmul.mubr.bf16.gmra.mxu0 %v1719
  %v1808 = vpop.f32.mrf.mxu0
  %v1809 = vadd.f32 0.0, %v1808
  %v1810 = vpop.f32.mrf.mxu0
  %v1811 = vadd.f32 0.0, %v1810
  %v1812 = vpop.f32.mrf.mxu0
  %v1813 = vpop.f32.mrf.mxu0
  %1814 = vdwg.mxu0
  %v1815 = vadd.f32 %v1586, %v1768
  %v1816 = vadd.f32 %v1587, %v1770
  %v1817 = vadd.f32 %v1588, %v1809
  %v1818 = vadd.f32 %v1589, %v1811
  %v1819 = vld [vmem:[%s0 + $0x2] sm:$0xff]
  %v1820 = vld [vmem:[%s0 + $0xa] sm:$0x3]
  %s1821 = scalar_lea.vmem %s2, 32
  %v1822 = vld [vmem:[%s1821] sm:$0xf]
  %v1825 = vunpack.c.l.s4 1966171168
  %v1826 = vunpack.c.0.s8 %v1825
  %v1827 = vlaneseq
  %v1828 = vshrl.u32 %v1827, 7
  %v1829 = vsub.s32 %v1826, %v1828
  %v1830 = vrot.slane %v1822, %v1829
  %v1831 = vcombine.high %v1830, %v1830
  %v1833 = vunpack.c.l.s4 1966171168
  %v1834 = vunpack.c.0.s8 %v1833
  %v1835 = vlaneseq
  %v1836 = vshrl.u32 %v1835, 7
  %v1837 = vsub.s32 %v1834, %v1836
  %v1838 = vrot.slane %v1830, %v1837
  %v1840 = vunpack.c.l.s4 1966171168
  %v1841 = vunpack.c.0.s8 %v1840
  %v1842 = vlaneseq
  %v1843 = vshrl.u32 %v1842, 7
  %v1844 = vsub.s32 %v1841, %v1843
  %v1845 = vrot.slane %v1831, %v1844
  %v1846 = vcombine.high %v1838, %v1838
  %v1847 = vcombine.high %v1845, %v1845
  %v1849 = vpack.i.b16 %v1838, %v1838
  %v1851 = vlaneseq
  %v1852 = vshrl.u32 %v1851, 7
  %v1853 = vsub.s32 0, %v1852
  %v1854 = vrot.slane %v1849, %v1853
  %v1856 = vpack.i.b16 %v1845, %v1845
  %v1858 = vlaneseq
  %v1859 = vshrl.u32 %v1858, 7
  %v1860 = vsub.s32 0, %v1859
  %v1861 = vrot.slane %v1856, %v1860
  %v1863 = vpack.i.b16 %v1846, %v1846
  %v1865 = vlaneseq
  %v1866 = vshrl.u32 %v1865, 7
  %v1867 = vsub.s32 0, %v1866
  %v1868 = vrot.slane %v1863, %v1867
  %v1870 = vpack.i.b16 %v1847, %v1847
  %v1872 = vlaneseq
  %v1873 = vshrl.u32 %v1872, 7
  %v1874 = vsub.s32 0, %v1873
  %v1875 = vrot.slane %v1870, %v1874
  %v1880 = vcombine.low %v1854, %v1861
  %v1881 = vcombine.low %v1868, %v1875
  %v1883 = vunpack.c.l.s4 1983009808
  %v1884 = vunpack.c.0.s8 %v1883
  %v1885 = vlaneseq
  %v1886 = vshrl.u32 %v1885, 7
  %v1887 = vsub.s32 %v1884, %v1886
  %v1888 = vrot.slane %v1880, %v1887
  %v1890 = vunpack.c.l.s4 1983009808
  %v1891 = vunpack.c.0.s8 %v1890
  %v1892 = vlaneseq
  %v1893 = vshrl.u32 %v1892, 7
  %v1894 = vsub.s32 %v1891, %v1893
  %v1895 = vrot.slane %v1881, %v1894
  %v1896 = vcombine.low %v1888, %v1895
  %1897 = vrot.lane.b32.xlu0 %v1896, 17
  %v1898 = vpop.permute.xlu0 %1897
  %v1899 = vrot.slane %v1898, 6
  %v1900 = vsel %vm368, %v1899, %v1898
  %v1903 = vmul.bf16 %v1819, %v1900
  %v1904 = vmul.bf16 %v1820, %v1899
  %s1905 = scalar_lea.vmem %s1, 32
  %v1906 = vld [vmem:[%s1905] sm:$0xf]
  %v1909 = vcombine.high %v1903, %v1903
  %v1911 = vunpack.c.l.s4 1983009808
  %v1912 = vunpack.c.0.s8 %v1911
  %v1913 = vlaneseq
  %v1914 = vshrl.u32 %v1913, 7
  %v1915 = vsub.s32 %v1912, %v1914
  %v1916 = vrot.slane %v1903, %v1915
  %v1918 = vunpack.c.l.s4 1983009808
  %v1919 = vunpack.c.0.s8 %v1918
  %v1920 = vlaneseq
  %v1921 = vshrl.u32 %v1920, 7
  %v1922 = vsub.s32 %v1919, %v1921
  %v1923 = vrot.slane %v1909, %v1922
  %v1924 = vcombine.high %v1916, %v1916
  %v1925 = vcombine.high %v1923, %v1923
  %v1927 = vunpack.c.l.s4 1983009808
  %v1928 = vunpack.c.0.s8 %v1927
  %v1929 = vlaneseq
  %v1930 = vshrl.u32 %v1929, 7
  %v1931 = vsub.s32 %v1928, %v1930
  %v1932 = vrot.slane %v1904, %v1931
  %1933 = vrot.lane.b32.xlu0 %v1916, 111
  %v1934 = vpop.permute.xlu0 %1933
  %1935 = vrot.lane.b32.xlu0 %v1924, 111
  %v1936 = vpop.permute.xlu0 %1935
  %1937 = vrot.lane.b32.xlu0 %v1923, 111
  %v1938 = vpop.permute.xlu0 %1937
  %1939 = vrot.lane.b32.xlu0 %v1925, 111
  %v1940 = vpop.permute.xlu0 %1939
  %1941 = vrot.lane.b32.xlu0 %v1932, 111
  %v1942 = vpop.permute.xlu0 %1941
  %v1943 = vsel %vm98, %v1934, %v1936
  %v1944 = vsel %vm98, %v1936, %v1938
  %v1945 = vsel %vm98, %v1938, %v1940
  %v1946 = vsel %vm98, %v1940, %v1942
  %v1948 = vsel %vm233, %v1906, 0
  %v1951 = vsel %vm237, %v1943, 0
  %v1954 = vsel %vm237, %v1944, 0
  %v1957 = vsel %vm237, %v1945, 0
  %v1960 = vsel %vm237, %v1946, 0
  %1962 = vmatprep.subr.bf16.mxu0 0
  %1963 = vmatpush1.bf16.msra.mxu0 0
  %1964 = vmatprep.subr.bf16.mxu0 0
  %1965 = vmatpush1.bf16.msra.mxu0 0
  %1966 = vmatprep.subr.bf16.mxu0 0
  %1967 = vmatpush1.bf16.msra.mxu0 0
  %1968 = vmatprep.subr.bf16.mxu0 0
  %1969 = vmatpush1.bf16.msra.mxu0 0
  %1970 = vmatprep.subr.bf16.mxu0 0
  %1971 = vmatpush1.bf16.msra.mxu0 0
  %1972 = vmatprep.subr.bf16.mxu0 0
  %1973 = vmatpush1.bf16.msra.mxu0 0
  %1974 = vmatprep.subr.bf16.mxu0 0
  %1975 = vmatpush1.bf16.msra.mxu0 0
  %1976 = vmatprep.subr.bf16.mxu0 %v1954
  %1977 = vmatpush1.bf16.msra.mxu0 %v1951
  %1978 = vmatprep.subr.bf16.mxu0 0
  %1979 = vmatpush2.bf16.msra.mxu0 0
  %1980 = vmatprep.subr.bf16.mxu0 0
  %1981 = vmatpush2.bf16.msra.mxu0 0
  %1982 = vmatprep.subr.bf16.mxu0 0
  %1983 = vmatpush2.bf16.msra.mxu0 0
  %1984 = vmatprep.subr.bf16.mxu0 0
  %1985 = vmatpush2.bf16.msra.mxu0 0
  %1986 = vmatprep.subr.bf16.mxu0 0
  %1987 = vmatpush2.bf16.msra.mxu0 0
  %1988 = vmatprep.subr.bf16.mxu0 0
  %1989 = vmatpush2.bf16.msra.mxu0 0
  %1990 = vmatprep.subr.bf16.mxu0 0
  %1991 = vmatpush2.bf16.msra.mxu0 0
  %1992 = vmatprep.subr.bf16.mxu0 0
  %1993 = vmatpush2.bf16.msra.mxu0 0
  %1994 = vmatprep.mubr.bf16.mxu0 0
  %1995 = vmatmul.mubr.bf16.gmra.mxu0 %v1948
  %v1996 = vpop.f32.mrf.mxu0
  %v1997 = vadd.f32 0.0, %v1996
  %v1998 = vpop.f32.mrf.mxu0
  %v1999 = vadd.f32 0.0, %v1998
  %v2000 = vpop.f32.mrf.mxu0
  %v2001 = vpop.f32.mrf.mxu0
  %2002 = vdwg.mxu0
  %2003 = vmatprep.subr.bf16.mxu0 0
  %2004 = vmatpush1.bf16.msra.mxu0 0
  %2005 = vmatprep.subr.bf16.mxu0 0
  %2006 = vmatpush1.bf16.msra.mxu0 0
  %2007 = vmatprep.subr.bf16.mxu0 0
  %2008 = vmatpush1.bf16.msra.mxu0 0
  %2009 = vmatprep.subr.bf16.mxu0 0
  %2010 = vmatpush1.bf16.msra.mxu0 0
  %2011 = vmatprep.subr.bf16.mxu0 0
  %2012 = vmatpush1.bf16.msra.mxu0 0
  %2013 = vmatprep.subr.bf16.mxu0 0
  %2014 = vmatpush1.bf16.msra.mxu0 0
  %2015 = vmatprep.subr.bf16.mxu0 0
  %2016 = vmatpush1.bf16.msra.mxu0 0
  %2017 = vmatprep.subr.bf16.mxu0 %v1960
  %2018 = vmatpush1.bf16.msra.mxu0 %v1957
  %2019 = vmatprep.subr.bf16.mxu0 0
  %2020 = vmatpush2.bf16.msra.mxu0 0
  %2021 = vmatprep.subr.bf16.mxu0 0
  %2022 = vmatpush2.bf16.msra.mxu0 0
  %2023 = vmatprep.subr.bf16.mxu0 0
  %2024 = vmatpush2.bf16.msra.mxu0 0
  %2025 = vmatprep.subr.bf16.mxu0 0
  %2026 = vmatpush2.bf16.msra.mxu0 0
  %2027 = vmatprep.subr.bf16.mxu0 0
  %2028 = vmatpush2.bf16.msra.mxu0 0
  %2029 = vmatprep.subr.bf16.mxu0 0
  %2030 = vmatpush2.bf16.msra.mxu0 0
  %2031 = vmatprep.subr.bf16.mxu0 0
  %2032 = vmatpush2.bf16.msra.mxu0 0
  %2033 = vmatprep.subr.bf16.mxu0 0
  %2034 = vmatpush2.bf16.msra.mxu0 0
  %2035 = vmatprep.mubr.bf16.mxu0 0
  %2036 = vmatmul.mubr.bf16.gmra.mxu0 %v1948
  %v2037 = vpop.f32.mrf.mxu0
  %v2038 = vadd.f32 0.0, %v2037
  %v2039 = vpop.f32.mrf.mxu0
  %v2040 = vadd.f32 0.0, %v2039
  %v2041 = vpop.f32.mrf.mxu0
  %v2042 = vpop.f32.mrf.mxu0
  %2043 = vdwg.mxu0
  %v2044 = vadd.f32 %v1815, %v1997
  %v2045 = vadd.f32 %v1816, %v1999
  %v2046 = vadd.f32 %v1817, %v2038
  %v2047 = vadd.f32 %v1818, %v2040
  %v2048 = vld [vmem:[%s3] sm:$0xff]
  %2050 = vset.pattern.permute.xlu0 0
  %2051 = vperm.xlu0 %2050, %v2048
  %v2052 = vpop.permute.xlu0 %2051
  %v2054 = vadd.f32 %v2044, %v2052
  %v2055 = vadd.f32 %v2045, %v2052
  %v2056 = vadd.f32 %v2046, %v2052
  %v2057 = vadd.f32 %v2047, %v2052
  %2058 = vst [vmem:[%s4] sm:$0xff] %v2054
  %2059 = vst [vmem:[%s4 + $0x8] sm:$0xff] %v2055
  %s2060 = scalar_lea.vmem %s4, 16
  %2061 = vst [vmem:[%s2060] sm:$0xff] %v2056
  %2062 = vst [vmem:[%s2060 + $0x8] sm:$0xff] %v2057
  // Predicated region
  $region18: #{ropconv3_forward.1} parent=0 // pred_check
    _
  $region19: #{ropconv3_forward.1} parent=0 // pred_check_branch
    %2064 = sbr.rel (0) target = $region21
  $region20: #{ropconv3_forward.1} parent=0 // pred_region
    _
  $region21: #{ropconv3_forward.1} parent=0 // pred_fallthru
    _
  // Predicated region
  $region22: #{ropconv3_forward.1} parent=0 // pred_check
    _
  $region23: #{ropconv3_forward.1} parent=0 // pred_check_branch
    %2066 = sbr.rel (0) target = $region25
  $region24: #{ropconv3_forward.1} parent=0 // pred_region
    _
  $region25: #{ropconv3_forward.1} parent=0 // pred_fallthru
    _

</llo_original>
